<compile_context>
chip_gen: v7x
topology: tpu7x:2x2x1
jax: 0.10.0
libtpu: 0.0.40
codegen_flags: <defaults>
</compile_context>

<pallas_src>
import math

import jax
import jax.numpy as jnp
import numpy as np
from jax.experimental import pallas as pl
from jax.experimental.pallas import tpu as pltpu

# ---- model hyper-parameters (small, consistent with the module) --------------
B = 2          # batch
L = 8          # sequence length
D_MODEL = 128  # d_model
D_FF = 256     # d_ff
N_HEAD = 4     # n_head
D_QKV = 32     # d_qkv
LN_EPS = 1e-5  # PyTorch nn.LayerNorm default


def encoder_layer_kernel(x_ref, bias_ref, wqkv_ref, wo_ref, w1_ref, w2_ref,
                         vec_ref, out_ref):
    """Whole batch: MHA -> add&norm -> FFN -> add&norm, single invocation."""
    rows = B * L

    # Residual-path activations stay f32; MXU operands are bf16 (f32 accumulate).
    x = x_ref[...].reshape(rows, D_MODEL)
    x_bf = x.astype(jnp.bfloat16)

    # Packed small vectors: one operand / one DMA, sliced in-register.
    vec = vec_ref[...]
    g1 = vec[0:1, :D_MODEL]
    beta1 = vec[1:2, :D_MODEL]
    b1 = vec[2:3, :]                 # (1, D_FF)
    b2 = vec[3:4, :D_MODEL]
    g2 = vec[4:5, :D_MODEL]
    beta2 = vec[5:6, :D_MODEL]

    # ---- fused QKV projection, head-leading batched matmul --------------------
    # (H, rows, D_MODEL) @ (H, D_MODEL, 3*D_QKV) -> (H, rows, 3*D_QKV)
    xh = jnp.broadcast_to(x_bf[None], (N_HEAD, rows, D_MODEL))
    qkv = jnp.einsum('hrm,hmd->hrd', xh, wqkv_ref[...],
                     preferred_element_type=jnp.float32)
    q = qkv[..., 0 * D_QKV:1 * D_QKV].astype(jnp.bfloat16)   # 1/sqrt(d_qkv) in Wq
    k = qkv[..., 1 * D_QKV:2 * D_QKV].astype(jnp.bfloat16)
    v = qkv[..., 2 * D_QKV:3 * D_QKV].astype(jnp.bfloat16)

    # Regroup rows: (H, B*L, D_QKV) -> (H*B, L, D_QKV).  Row-major order is
    # preserved and L == sublane tile, so this is a free re-tiling (no relayout).
    G = N_HEAD * B
    qg = q.reshape(G, L, D_QKV)
    kg = k.reshape(G, L, D_QKV)
    vg = v.reshape(G, L, D_QKV)

    # ---- batched attention scores + masked softmax (f32) ----------------------
    s = jnp.einsum('gqd,gkd->gqk', qg, kg, preferred_element_type=jnp.float32)
    s = s + bias_ref[...]            # additive -1e9 bias, pre-stacked in wrapper
    m = jnp.max(s, axis=-1, keepdims=True)
    e = jnp.exp(s - m)
    p = e * pl.reciprocal(jnp.sum(e, axis=-1, keepdims=True), approx=True)

    # ---- batched P @ V ---------------------------------------------------------
    o = jnp.einsum('gqk,gkd->gqd', p.astype(jnp.bfloat16), vg,
                   preferred_element_type=jnp.float32)        # (G, L, D_QKV)

    # ---- output projection: per-head batched matmul, then sum over heads ------
    oh = o.reshape(N_HEAD, rows, D_QKV).astype(jnp.bfloat16)  # free reshape back
    attn_h = jnp.einsum('hrd,hdm->hrm', oh, wo_ref[...],
                        preferred_element_type=jnp.float32)   # (H, rows, D_MODEL)
    attn = jnp.sum(attn_h, axis=0)                            # (rows, D_MODEL)

    # dropout1 / attention dropout: identity (eval mode).
    # ---- add & LayerNorm 1 -----------------------------------------------------
    h1 = attn + x
    mu1 = jnp.mean(h1, axis=-1, keepdims=True)
    var1 = jnp.mean((h1 - mu1) ** 2, axis=-1, keepdims=True)
    h1n = (h1 - mu1) * jax.lax.rsqrt(var1 + LN_EPS) * g1 + beta1

    # ---- position-wise feed-forward --------------------------------------------
    f = jnp.dot(h1n.astype(jnp.bfloat16), w1_ref[...],
                preferred_element_type=jnp.float32) + b1
    f = jnp.maximum(f, 0.0)
    f = jnp.dot(f.astype(jnp.bfloat16), w2_ref[...],
                preferred_element_type=jnp.float32) + b2

    # dropout2: identity (eval mode)
    # ---- add & LayerNorm 2 -------------------------------------------------------
    h2 = f + h1n
    mu2 = jnp.mean(h2, axis=-1, keepdims=True)
    var2 = jnp.mean((h2 - mu2) ** 2, axis=-1, keepdims=True)
    out = (h2 - mu2) * jax.lax.rsqrt(var2 + LN_EPS) * g2 + beta2
    out_ref[...] = out.reshape(B, L, D_MODEL)


def pack_params(params):
    """Pack PyTorch-layout params into MXU-friendly operands.

    wqkv: (N_HEAD, D_MODEL, 3*D_QKV) bf16, head-leading, scale folded into Wq.
    wo:   (N_HEAD, D_QKV, D_MODEL)   bf16 (natural layout).
    vec:  (8, D_FF) f32 with rows [g1, beta1, b1, b2, g2, beta2, 0, 0].
    """
    (wq, wk, wv, wo, g1, bta1, w1, b1, w2, b2, g2, bta2) = params
    scale = 1.0 / math.sqrt(D_QKV)
    wqkv = jnp.concatenate([wq * scale, wk, wv], axis=2).astype(jnp.bfloat16)
    wo_bf = wo.astype(jnp.bfloat16)

    vec = jnp.zeros((8, D_FF), jnp.float32)
    vec = vec.at[0, :D_MODEL].set(g1[0])
    vec = vec.at[1, :D_MODEL].set(bta1[0])
    vec = vec.at[2, :].set(b1[0])
    vec = vec.at[3, :D_MODEL].set(b2[0])
    vec = vec.at[4, :D_MODEL].set(g2[0])
    vec = vec.at[5, :D_MODEL].set(bta2[0])

    return (wqkv, wo_bf, w1.astype(jnp.bfloat16), w2.astype(jnp.bfloat16), vec)


def make_encoder_layer():
    vmem = lambda: pl.BlockSpec(memory_space=pltpu.MemorySpace.VMEM)
    call = pl.pallas_call(
        encoder_layer_kernel,
        out_shape=jax.ShapeDtypeStruct((B, L, D_MODEL), jnp.float32),
        in_specs=[vmem() for _ in range(7)],
        out_specs=vmem(),
    )

    @jax.jit
    def run(x, mask, packed):
        wqkv, wo, w1, w2, vec = packed
        # mask: 1.0 => masked out.  Convert once to an additive -1e9 bias and
        # pre-stack to the kernel's (n_head*batch, L, L) score layout (g = h*B + b).
        bias = mask.astype(jnp.float32) * jnp.float32(-1e9)            # (B, L, L)
        bias_g = jnp.broadcast_to(bias[None], (N_HEAD, B, L, L)) \
                    .reshape(N_HEAD * B, L, L)
        return call(x, bias_g, wqkv, wo, w1, w2, vec)

    return run


def reference_encoder_layer(x, mask, params, *, mxu_dtype=jnp.float32):
    """Pure-JAX reference mirroring the PyTorch forward (dropout = identity).

    mxu_dtype=float32  -> exact f32 spec.
    mxu_dtype=bfloat16 -> matmul operands cast to bf16 (f32 accumulation), i.e. the
    same precision choices as the kernel; only the approx reciprocal and
    accumulation order differ.
    """
    (wq, wk, wv, wo, g1, bta1, w1, b1, w2, b2, g2, bta2) = params
    scale = 1.0 / math.sqrt(D_QKV)
    c = lambda t: t.astype(mxu_dtype)

    def layer_norm(h, g, bt):
        mu = jnp.mean(h, axis=-1, keepdims=True)
        var = jnp.mean((h - mu) ** 2, axis=-1, keepdims=True)
        return (h - mu) / jnp.sqrt(var + LN_EPS) * g + bt

    Q = jnp.einsum('blm,nmd->bnld', c(x), c(wq * scale),
                   preferred_element_type=jnp.float32)
    K = jnp.einsum('blm,nmd->bnld', c(x), c(wk), preferred_element_type=jnp.float32)
    V = jnp.einsum('blm,nmd->bnld', c(x), c(wv), preferred_element_type=jnp.float32)
    s = jnp.einsum('bnld,bnkd->bnlk', c(Q), c(K), preferred_element_type=jnp.float32)
    s = jnp.where(mask[:, None, :, :] > 0.5, -1e9, s)
    p = jax.nn.softmax(s, axis=-1)
    o = jnp.einsum('bnlk,bnkd->bnld', c(p), c(V), preferred_element_type=jnp.float32)
    attn = jnp.einsum('bnld,ndm->blm', c(o), c(wo), preferred_element_type=jnp.float32)

    h1 = layer_norm(attn + x, g1[0], bta1[0])
    f = jnp.maximum(jnp.einsum('bld,df->blf', c(h1), c(w1),
                               preferred_element_type=jnp.float32) + b1[0], 0.0)
    f = jnp.einsum('blf,fd->bld', c(f), c(w2),
                   preferred_element_type=jnp.float32) + b2[0]
    return layer_norm(f + h1, g2[0], bta2[0])


def make_params(key):
    ks = jax.random.split(key, 12)
    xavier = lambda k, shape, fan_in, fan_out: (
        jax.random.normal(k, shape, jnp.float32) * math.sqrt(2.0 / (fan_in + fan_out)))
    wq = xavier(ks[0], (N_HEAD, D_MODEL, D_QKV), D_MODEL, D_QKV)
    wk = xavier(ks[1], (N_HEAD, D_MODEL, D_QKV), D_MODEL, D_QKV)
    wv = xavier(ks[2], (N_HEAD, D_MODEL, D_QKV), D_MODEL, D_QKV)
    wo = xavier(ks[3], (N_HEAD, D_QKV, D_MODEL), D_QKV, D_MODEL)
    w1 = xavier(ks[4], (D_MODEL, D_FF), D_MODEL, D_FF)
    b1 = jax.random.normal(ks[5], (1, D_FF), jnp.float32) * 0.01
    w2 = xavier(ks[6], (D_FF, D_MODEL), D_FF, D_MODEL)
    b2 = jax.random.normal(ks[7], (1, D_MODEL), jnp.float32) * 0.01
    # LayerNorm params randomized (instead of the 1/0 init) so the test actually
    # exercises the packed-vector slicing.
    g1 = 1.0 + 0.1 * jax.random.normal(ks[8], (1, D_MODEL), jnp.float32)
    bta1 = 0.1 * jax.random.normal(ks[9], (1, D_MODEL), jnp.float32)
    g2 = 1.0 + 0.1 * jax.random.normal(ks[10], (1, D_MODEL), jnp.float32)
    bta2 = 0.1 * jax.random.normal(ks[11], (1, D_MODEL), jnp.float32)
    return (wq, wk, wv, wo, g1, bta1, w1, b1, w2, b2, g2, bta2)


if __name__ == "__main__":
    key = jax.random.PRNGKey(0)
    k_x, k_p = jax.random.split(key)

    x = jax.random.normal(k_x, (B, L, D_MODEL), jnp.float32)
    # Padding-style mask: disallow attention to the last 2 key positions.
    mask_np = np.zeros((B, L, L), np.float32)
    mask_np[:, :, -2:] = 1.0
    mask = jnp.asarray(mask_np)

    params = make_params(k_p)
    packed = pack_params(params)

    encoder = make_encoder_layer()
    out = jax.block_until_ready(encoder(x, mask, packed))

    # 1) Structural check against a precision-matched (bf16 MXU operand) reference:
    #    remaining differences are only the approx EUP reciprocal and accumulation
    #    order, so a per-head packing / ordering bug would fail loudly here.
    ref_bf16 = reference_encoder_layer(x, mask, params, mxu_dtype=jnp.bfloat16)
    np.testing.assert_allclose(np.asarray(out), np.asarray(ref_bf16),
                               rtol=3e-2, atol=3e-2)

    # 2) Spec check against the pure-f32 PyTorch forward (dropout = identity);
    #    looser tolerance accounts for bf16 MXU inputs in the kernel.
    ref_f32 = reference_encoder_layer(x, mask, params, mxu_dtype=jnp.float32)
    np.testing.assert_allclose(np.asarray(out), np.asarray(ref_f32),
                               rtol=1e-1, atol=1e-1)

    print("KERNEL_OK")
</pallas_src>

<mosaic_0001>
module attributes {stable_mosaic.version = 11 : i64} {
  func.func @encoder_layer_kernel(%arg0: memref<2x8x128xf32, #tpu.memory_space<vmem>>, %arg1: memref<8x8x8xf32, #tpu.memory_space<vmem>>, %arg2: memref<4x128x96xbf16, #tpu.memory_space<vmem>>, %arg3: memref<4x32x128xbf16, #tpu.memory_space<vmem>>, %arg4: memref<128x256xbf16, #tpu.memory_space<vmem>>, %arg5: memref<256x128xbf16, #tpu.memory_space<vmem>>, %arg6: memref<8x256xf32, #tpu.memory_space<vmem>>, %arg7: memref<2x8x128xf32, #tpu.memory_space<vmem>>) attributes {dimension_semantics = [], scalar_prefetch = 0 : i64, scratch_operands = 0 : i64, tpu.core_type = #tpu.core_type<tc>} {
    %c0 = arith.constant 0 : index
    %c0_0 = arith.constant 0 : index
    %c0_1 = arith.constant 0 : index
    %0 = vector.load %arg0[%c0, %c0_0, %c0_1] : memref<2x8x128xf32, #tpu.memory_space<vmem>>, vector<2x8x128xf32>
    %1 = vector.shape_cast %0 : vector<2x8x128xf32> to vector<16x128xf32>
    %2 = arith.truncf %1 : vector<16x128xf32> to vector<16x128xbf16>
    %c0_2 = arith.constant 0 : index
    %c0_3 = arith.constant 0 : index
    %3 = vector.load %arg6[%c0_2, %c0_3] : memref<8x256xf32, #tpu.memory_space<vmem>>, vector<8x256xf32>
    %4 = vector.extract_strided_slice %3 {offsets = [0, 0], sizes = [1, 128], strides = [1, 1]} : vector<8x256xf32> to vector<1x128xf32>
    %5 = vector.extract_strided_slice %3 {offsets = [1, 0], sizes = [1, 128], strides = [1, 1]} : vector<8x256xf32> to vector<1x128xf32>
    %6 = vector.extract_strided_slice %3 {offsets = [2, 0], sizes = [1, 256], strides = [1, 1]} : vector<8x256xf32> to vector<1x256xf32>
    %7 = vector.extract_strided_slice %3 {offsets = [3, 0], sizes = [1, 128], strides = [1, 1]} : vector<8x256xf32> to vector<1x128xf32>
    %8 = vector.extract_strided_slice %3 {offsets = [4, 0], sizes = [1, 128], strides = [1, 1]} : vector<8x256xf32> to vector<1x128xf32>
    %9 = vector.extract_strided_slice %3 {offsets = [5, 0], sizes = [1, 128], strides = [1, 1]} : vector<8x256xf32> to vector<1x128xf32>
    %10 = vector.shape_cast %2 : vector<16x128xbf16> to vector<1x16x128xbf16>
    %11 = vector.shape_cast %10 : vector<1x16x128xbf16> to vector<1x16x128xbf16>
    %12 = vector.broadcast %11 : vector<1x16x128xbf16> to vector<4x16x128xbf16>
    %c0_4 = arith.constant 0 : index
    %c0_5 = arith.constant 0 : index
    %c0_6 = arith.constant 0 : index
    %13 = vector.load %arg2[%c0_4, %c0_5, %c0_6] : memref<4x128x96xbf16, #tpu.memory_space<vmem>>, vector<4x128x96xbf16>
    "tpu.trace_start"() <{level = 10 : i32, message = "hrm,hmd->hrd"}> : () -> ()
    %cst = arith.constant dense<0.000000e+00> : vector<4x16x96xf32>
    %14 = tpu.matmul %12, %13, %cst {dimension_numbers = #tpu.dot_dimension_numbers<[2], [1], [1], [2], [0, 0, 0, 1, 1, 2], [0], [0]>} : vector<4x16x128xbf16>, vector<4x128x96xbf16>, vector<4x16x96xf32> -> vector<4x16x96xf32>
    "tpu.trace_stop"() : () -> ()
    %15 = vector.extract_strided_slice %14 {offsets = [0, 0, 0], sizes = [4, 16, 32], strides = [1, 1, 1]} : vector<4x16x96xf32> to vector<4x16x32xf32>
    %16 = arith.truncf %15 : vector<4x16x32xf32> to vector<4x16x32xbf16>
    %17 = vector.extract_strided_slice %14 {offsets = [0, 0, 32], sizes = [4, 16, 32], strides = [1, 1, 1]} : vector<4x16x96xf32> to vector<4x16x32xf32>
    %18 = arith.truncf %17 : vector<4x16x32xf32> to vector<4x16x32xbf16>
    %19 = vector.extract_strided_slice %14 {offsets = [0, 0, 64], sizes = [4, 16, 32], strides = [1, 1, 1]} : vector<4x16x96xf32> to vector<4x16x32xf32>
    %20 = arith.truncf %19 : vector<4x16x32xf32> to vector<4x16x32xbf16>
    %21 = vector.shape_cast %16 : vector<4x16x32xbf16> to vector<8x8x32xbf16>
    %22 = vector.shape_cast %18 : vector<4x16x32xbf16> to vector<8x8x32xbf16>
    %23 = vector.shape_cast %20 : vector<4x16x32xbf16> to vector<8x8x32xbf16>
    "tpu.trace_start"() <{level = 10 : i32, message = "gqd,gkd->gqk"}> : () -> ()
    %cst_7 = arith.constant dense<0.000000e+00> : vector<8x8x8xf32>
    %24 = tpu.matmul %21, %22, %cst_7 {dimension_numbers = #tpu.dot_dimension_numbers<[2], [2], [1], [1], [0, 0, 0, 1, 1, 1], [0], [0]>} : vector<8x8x32xbf16>, vector<8x8x32xbf16>, vector<8x8x8xf32> -> vector<8x8x8xf32>
    "tpu.trace_stop"() : () -> ()
    %c0_8 = arith.constant 0 : index
    %c0_9 = arith.constant 0 : index
    %c0_10 = arith.constant 0 : index
    %25 = vector.load %arg1[%c0_8, %c0_9, %c0_10] : memref<8x8x8xf32, #tpu.memory_space<vmem>>, vector<8x8x8xf32>
    %26 = arith.addf %24, %25 : vector<8x8x8xf32>
    %cst_11 = arith.constant dense<0xFF800000> : vector<8x8xf32>
    %27 = vector.multi_reduction <maximumf>, %26, %cst_11 [2] : vector<8x8x8xf32> to vector<8x8xf32>
    %28 = vector.shape_cast %27 : vector<8x8xf32> to vector<8x8x1xf32>
    %29 = vector.broadcast %28 : vector<8x8x1xf32> to vector<8x8x8xf32>
    %30 = arith.subf %26, %29 : vector<8x8x8xf32>
    %31 = math.exp %30 : vector<8x8x8xf32>
    %cst_12 = arith.constant dense<0.000000e+00> : vector<8x8xf32>
    %32 = vector.multi_reduction <add>, %31, %cst_12 [2] : vector<8x8x8xf32> to vector<8x8xf32>
    %33 = vector.shape_cast %32 : vector<8x8xf32> to vector<8x8x1xf32>
    %34 = tpu.reciprocal %33 {approx = true} : vector<8x8x1xf32> -> vector<8x8x1xf32>
    %35 = vector.broadcast %34 : vector<8x8x1xf32> to vector<8x8x8xf32>
    %36 = arith.mulf %31, %35 : vector<8x8x8xf32>
    %37 = arith.truncf %36 : vector<8x8x8xf32> to vector<8x8x8xbf16>
    "tpu.trace_start"() <{level = 10 : i32, message = "gqk,gkd->gqd"}> : () -> ()
    %cst_13 = arith.constant dense<0.000000e+00> : vector<8x8x32xf32>
    %38 = tpu.matmul %37, %23, %cst_13 {dimension_numbers = #tpu.dot_dimension_numbers<[2], [1], [1], [2], [0, 0, 0, 1, 1, 2], [0], [0]>} : vector<8x8x8xbf16>, vector<8x8x32xbf16>, vector<8x8x32xf32> -> vector<8x8x32xf32>
    "tpu.trace_stop"() : () -> ()
    %39 = vector.shape_cast %38 : vector<8x8x32xf32> to vector<4x16x32xf32>
    %40 = arith.truncf %39 : vector<4x16x32xf32> to vector<4x16x32xbf16>
    %c0_14 = arith.constant 0 : index
    %c0_15 = arith.constant 0 : index
    %c0_16 = arith.constant 0 : index
    %41 = vector.load %arg3[%c0_14, %c0_15, %c0_16] : memref<4x32x128xbf16, #tpu.memory_space<vmem>>, vector<4x32x128xbf16>
    "tpu.trace_start"() <{level = 10 : i32, message = "hrd,hdm->hrm"}> : () -> ()
    %cst_17 = arith.constant dense<0.000000e+00> : vector<4x16x128xf32>
    %42 = tpu.matmul %40, %41, %cst_17 {dimension_numbers = #tpu.dot_dimension_numbers<[2], [1], [1], [2], [0, 0, 0, 1, 1, 2], [0], [0]>} : vector<4x16x32xbf16>, vector<4x32x128xbf16>, vector<4x16x128xf32> -> vector<4x16x128xf32>
    "tpu.trace_stop"() : () -> ()
    %cst_18 = arith.constant dense<0.000000e+00> : vector<16x128xf32>
    %43 = vector.multi_reduction <add>, %42, %cst_18 [0] : vector<4x16x128xf32> to vector<16x128xf32>
    %44 = arith.addf %43, %1 : vector<16x128xf32>
    %cst_19 = arith.constant dense<0.000000e+00> : vector<16xf32>
    %45 = vector.multi_reduction <add>, %44, %cst_19 [1] : vector<16x128xf32> to vector<16xf32>
    %46 = vector.shape_cast %45 : vector<16xf32> to vector<16x1xf32>
    %cst_20 = arith.constant 1.280000e+02 : f32
    %47 = vector.broadcast %cst_20 : f32 to vector<16x1xf32>
    %48 = arith.divf %46, %47 : vector<16x1xf32>
    %49 = vector.broadcast %48 : vector<16x1xf32> to vector<16x128xf32>
    %50 = arith.subf %44, %49 : vector<16x128xf32>
    %51 = arith.mulf %50, %50 : vector<16x128xf32>
    %cst_21 = arith.constant dense<0.000000e+00> : vector<16xf32>
    %52 = vector.multi_reduction <add>, %51, %cst_21 [1] : vector<16x128xf32> to vector<16xf32>
    %53 = vector.shape_cast %52 : vector<16xf32> to vector<16x1xf32>
    %cst_22 = arith.constant 1.280000e+02 : f32
    %54 = vector.broadcast %cst_22 : f32 to vector<16x1xf32>
    %55 = arith.divf %53, %54 : vector<16x1xf32>
    %56 = vector.broadcast %48 : vector<16x1xf32> to vector<16x128xf32>
    %57 = arith.subf %44, %56 : vector<16x128xf32>
    %cst_23 = arith.constant 9.99999974E-6 : f32
    %58 = vector.broadcast %cst_23 : f32 to vector<16x1xf32>
    %59 = arith.addf %55, %58 : vector<16x1xf32>
    %60 = math.rsqrt %59 : vector<16x1xf32>
    %61 = vector.broadcast %60 : vector<16x1xf32> to vector<16x128xf32>
    %62 = arith.mulf %57, %61 : vector<16x128xf32>
    %63 = vector.broadcast %4 : vector<1x128xf32> to vector<16x128xf32>
    %64 = arith.mulf %62, %63 : vector<16x128xf32>
    %65 = vector.broadcast %5 : vector<1x128xf32> to vector<16x128xf32>
    %66 = arith.addf %64, %65 : vector<16x128xf32>
    %67 = arith.truncf %66 : vector<16x128xf32> to vector<16x128xbf16>
    %c0_24 = arith.constant 0 : index
    %c0_25 = arith.constant 0 : index
    %68 = vector.load %arg4[%c0_24, %c0_25] : memref<128x256xbf16, #tpu.memory_space<vmem>>, vector<128x256xbf16>
    %cst_26 = arith.constant dense<0.000000e+00> : vector<16x256xf32>
    %69 = tpu.matmul %67, %68, %cst_26 {dimension_numbers = #tpu.dot_dimension_numbers<[1], [0], [0], [1], [0, 0, 1, 1], [], []>} : vector<16x128xbf16>, vector<128x256xbf16>, vector<16x256xf32> -> vector<16x256xf32>
    %70 = vector.broadcast %6 : vector<1x256xf32> to vector<16x256xf32>
    %71 = arith.addf %69, %70 : vector<16x256xf32>
    %cst_27 = arith.constant 0.000000e+00 : f32
    %72 = vector.broadcast %cst_27 : f32 to vector<16x256xf32>
    %73 = arith.maximumf %71, %72 : vector<16x256xf32>
    %74 = arith.truncf %73 : vector<16x256xf32> to vector<16x256xbf16>
    %c0_28 = arith.constant 0 : index
    %c0_29 = arith.constant 0 : index
    %75 = vector.load %arg5[%c0_28, %c0_29] : memref<256x128xbf16, #tpu.memory_space<vmem>>, vector<256x128xbf16>
    %cst_30 = arith.constant dense<0.000000e+00> : vector<16x128xf32>
    %76 = tpu.matmul %74, %75, %cst_30 {dimension_numbers = #tpu.dot_dimension_numbers<[1], [0], [0], [1], [0, 0, 1, 1], [], []>} : vector<16x256xbf16>, vector<256x128xbf16>, vector<16x128xf32> -> vector<16x128xf32>
    %77 = vector.broadcast %7 : vector<1x128xf32> to vector<16x128xf32>
    %78 = arith.addf %76, %77 : vector<16x128xf32>
    %79 = arith.addf %78, %66 : vector<16x128xf32>
    %cst_31 = arith.constant dense<0.000000e+00> : vector<16xf32>
    %80 = vector.multi_reduction <add>, %79, %cst_31 [1] : vector<16x128xf32> to vector<16xf32>
    %81 = vector.shape_cast %80 : vector<16xf32> to vector<16x1xf32>
    %cst_32 = arith.constant 1.280000e+02 : f32
    %82 = vector.broadcast %cst_32 : f32 to vector<16x1xf32>
    %83 = arith.divf %81, %82 : vector<16x1xf32>
    %84 = vector.broadcast %83 : vector<16x1xf32> to vector<16x128xf32>
    %85 = arith.subf %79, %84 : vector<16x128xf32>
    %86 = arith.mulf %85, %85 : vector<16x128xf32>
    %cst_33 = arith.constant dense<0.000000e+00> : vector<16xf32>
    %87 = vector.multi_reduction <add>, %86, %cst_33 [1] : vector<16x128xf32> to vector<16xf32>
    %88 = vector.shape_cast %87 : vector<16xf32> to vector<16x1xf32>
    %cst_34 = arith.constant 1.280000e+02 : f32
    %89 = vector.broadcast %cst_34 : f32 to vector<16x1xf32>
    %90 = arith.divf %88, %89 : vector<16x1xf32>
    %91 = vector.broadcast %83 : vector<16x1xf32> to vector<16x128xf32>
    %92 = arith.subf %79, %91 : vector<16x128xf32>
    %cst_35 = arith.constant 9.99999974E-6 : f32
    %93 = vector.broadcast %cst_35 : f32 to vector<16x1xf32>
    %94 = arith.addf %90, %93 : vector<16x1xf32>
    %95 = math.rsqrt %94 : vector<16x1xf32>
    %96 = vector.broadcast %95 : vector<16x1xf32> to vector<16x128xf32>
    %97 = arith.mulf %92, %96 : vector<16x128xf32>
    %98 = vector.broadcast %8 : vector<1x128xf32> to vector<16x128xf32>
    %99 = arith.mulf %97, %98 : vector<16x128xf32>
    %100 = vector.broadcast %9 : vector<1x128xf32> to vector<16x128xf32>
    %101 = arith.addf %99, %100 : vector<16x128xf32>
    %102 = vector.shape_cast %101 : vector<16x128xf32> to vector<2x8x128xf32>
    %c0_36 = arith.constant 0 : index
    %c0_37 = arith.constant 0 : index
    %c0_38 = arith.constant 0 : index
    %103 = vector.load %arg7[%c0_36, %c0_37, %c0_38] : memref<2x8x128xf32, #tpu.memory_space<vmem>>, vector<2x8x128xf32>
    tpu.vector_store %arg7[%c0_36, %c0_37, %c0_38], %102 {strides = array<i32>} : memref<2x8x128xf32, #tpu.memory_space<vmem>>, vector<2x8x128xf32>,
    return
  }
}

</mosaic_0001>

<llo_original>
// kernel: run.1
$region0: #{run.1}
  #allocation0 [shape = 'u32[]', space=smem, size = 0x4, offset = 0x4, fixed_abs, tag = 'smem constant byte address 0x4 - core index']
  #allocation1 [shape = 'u32[144,128]{1,0:T(1,128)}', space=vmem, size = 0x12000, scoped, tag = 'internal scratch']
  %s0 = inlined_call_operand.vmem [shape: f32[2,8,128], index: 0, kind: input, shape index: {}]
  %s1 = inlined_call_operand.vmem [shape: f32[8,8,8], index: 1, kind: input, shape index: {}]
  %s2 = inlined_call_operand.vmem [shape: bf16[4,128,96], index: 2, kind: input, shape index: {}]
  %s3 = inlined_call_operand.vmem [shape: bf16[4,32,128], index: 3, kind: input, shape index: {}]
  %s4 = inlined_call_operand.vmem [shape: bf16[128,256], index: 4, kind: input, shape index: {}]
  %s5 = inlined_call_operand.vmem [shape: bf16[256,128], index: 5, kind: input, shape index: {}]
  %s6 = inlined_call_operand.vmem [shape: f32[8,256], index: 6, kind: input, shape index: {}]
  %s7 = inlined_call_operand.hbm [shape: f32[2,8,128], index: 7, kind: output, shape index: {}]
  %s8 = sld [smem:[#allocation0]]
  $region38: #{run.1} parent=0
    _
  %s10 = ssub.s32 1, %s8
  %s11 = scalar_select 0, %s10, %s8
  $region1: #{run.1} parent=0
    #allocation2 [shape = 'u8[8192]{0}', space=vmem, size = 0x2000, scoped, tag = 'output window, operand 0, single buffered']
    #allocation3 [shape = 's32[1]{0}', space=sflag, size = 0x4, scoped, tag = 'scoped memory for run.1']
    %12 = vsyncpa [#allocation3], 0
    // Predicated region
    $region2: #{run.1} parent=1 // pred_check
      _
    $region3: #{run.1} parent=1 // pred_check_branch
      %14 = sbr.rel (0) target = $region5
    $region4: #{run.1} parent=1 // pred_region
      _
    $region5: #{run.1} parent=1 // pred_fallthru
      _
    // Predicated region
    $region6: #{run.1} parent=1 // pred_check
      _
    $region7: #{run.1} parent=1 // pred_check_branch
      %16 = sbr.rel (0) target = $region9
    $region8: #{run.1} parent=1 // pred_region
      _
    $region9: #{run.1} parent=1 // pred_fallthru
      _
    // Predicated region
    $region10: #{run.1} parent=1 // pred_check
      _
    $region11: #{run.1} parent=1 // pred_check_branch
      %18 = sbr.rel (0) target = $region13
    $region12: #{run.1} parent=1 // pred_region
      _
    $region13: #{run.1} parent=1 // pred_fallthru
      _
    // Predicated region
    $region14: #{run.1} parent=1 // pred_check
      _
    $region15: #{run.1} parent=1 // pred_check_branch
      %20 = sbr.rel (0) target = $region17
    $region16: #{run.1} parent=1 // pred_region
      _
    $region17: #{run.1} parent=1 // pred_fallthru
      _
    // Predicated region
    $region18: #{run.1} parent=1 // pred_check
      _
    $region19: #{run.1} parent=1 // pred_check_branch
      %22 = sbr.rel (0) target = $region21
    $region20: #{run.1} parent=1 // pred_region
      _
    $region21: #{run.1} parent=1 // pred_fallthru
      _
    // Predicated region
    $region22: #{run.1} parent=1 // pred_check
      _
    $region23: #{run.1} parent=1 // pred_check_branch
      %24 = sbr.rel (0) target = $region25
    $region24: #{run.1} parent=1 // pred_region
      _
    $region25: #{run.1} parent=1 // pred_fallthru
      _
    // Predicated region
    $region26: #{run.1} parent=1 // pred_check
      _
    $region27: #{run.1} parent=1 // pred_check_branch
      %26 = sbr.rel (0) target = $region29
    $region28: #{run.1} parent=1 // pred_region
      _
    $region29: #{run.1} parent=1 // pred_fallthru
      _
    %v28 = vld [vmem:[%s0] sm:$0xff]
    %v29 = vld [vmem:[%s0 + $0x8] sm:$0xff]
    %v30 = vpack.c.bf16 %v29, %v28
    %v31 = vld [vmem:[%s6] sm:$0xff]
    %v32 = vld [vmem:[%s6 + $0x8] sm:$0xff]
    %v33 = vld [vmem:[%s2] sm:$0xf]
    %v34 = vld [vmem:[%s2 + $0x4] sm:$0xf]
    %v35 = vld [vmem:[%s2 + $0x8] sm:$0xf]
    %v36 = vld [vmem:[%s2 + $0xc] sm:$0xf]
    %v37 = vld [vmem:[%s2 + $0x10] sm:$0xf]
    %v38 = vld [vmem:[%s2 + $0x14] sm:$0xf]
    %v39 = vld [vmem:[%s2 + $0x18] sm:$0xf]
    %v40 = vld [vmem:[%s2 + $0x1c] sm:$0xf]
    %v41 = vld [vmem:[%s2 + $0x20] sm:$0xf]
    %v42 = vld [vmem:[%s2 + $0x24] sm:$0xf]
    %v43 = vld [vmem:[%s2 + $0x28] sm:$0xf]
    %v44 = vld [vmem:[%s2 + $0x2c] sm:$0xf]
    %v45 = vld [vmem:[%s2 + $0x30] sm:$0xf]
    %v46 = vld [vmem:[%s2 + $0x34] sm:$0xf]
    %v47 = vld [vmem:[%s2 + $0x38] sm:$0xf]
    %v48 = vld [vmem:[%s2 + $0x3c] sm:$0xf]
    %v49 = vld [vmem:[%s2 + $0x40] sm:$0xf]
    %v50 = vld [vmem:[%s2 + $0x44] sm:$0xf]
    %v51 = vld [vmem:[%s2 + $0x48] sm:$0xf]
    %v52 = vld [vmem:[%s2 + $0x4c] sm:$0xf]
    %v53 = vld [vmem:[%s2 + $0x50] sm:$0xf]
    %v54 = vld [vmem:[%s2 + $0x54] sm:$0xf]
    %v55 = vld [vmem:[%s2 + $0x58] sm:$0xf]
    %v56 = vld [vmem:[%s2 + $0x5c] sm:$0xf]
    %v57 = vld [vmem:[%s2 + $0x60] sm:$0xf]
    %v58 = vld [vmem:[%s2 + $0x64] sm:$0xf]
    %v59 = vld [vmem:[%s2 + $0x68] sm:$0xf]
    %v60 = vld [vmem:[%s2 + $0x6c] sm:$0xf]
    %v61 = vld [vmem:[%s2 + $0x70] sm:$0xf]
    %v62 = vld [vmem:[%s2 + $0x74] sm:$0xf]
    %v63 = vld [vmem:[%s2 + $0x78] sm:$0xf]
    %v64 = vld [vmem:[%s2 + $0x7c] sm:$0xf]
    %v65 = vld [vmem:[%s2 + $0x80] sm:$0xf]
    %v66 = vld [vmem:[%s2 + $0x84] sm:$0xf]
    %v67 = vld [vmem:[%s2 + $0x88] sm:$0xf]
    %v68 = vld [vmem:[%s2 + $0x8c] sm:$0xf]
    %v69 = vld [vmem:[%s2 + $0x90] sm:$0xf]
    %v70 = vld [vmem:[%s2 + $0x94] sm:$0xf]
    %v71 = vld [vmem:[%s2 + $0x98] sm:$0xf]
    %v72 = vld [vmem:[%s2 + $0x9c] sm:$0xf]
    %v73 = vld [vmem:[%s2 + $0xa0] sm:$0xf]
    %v74 = vld [vmem:[%s2 + $0xa4] sm:$0xf]
    %v75 = vld [vmem:[%s2 + $0xa8] sm:$0xf]
    %v76 = vld [vmem:[%s2 + $0xac] sm:$0xf]
    %v77 = vld [vmem:[%s2 + $0xb0] sm:$0xf]
    %v78 = vld [vmem:[%s2 + $0xb4] sm:$0xf]
    %v79 = vld [vmem:[%s2 + $0xb8] sm:$0xf]
    %v80 = vld [vmem:[%s2 + $0xbc] sm:$0xf]
    %v81 = vld [vmem:[%s2 + $0xc0] sm:$0xf]
    %v82 = vld [vmem:[%s2 + $0xc4] sm:$0xf]
    %v83 = vld [vmem:[%s2 + $0xc8] sm:$0xf]
    %v84 = vld [vmem:[%s2 + $0xcc] sm:$0xf]
    %v85 = vld [vmem:[%s2 + $0xd0] sm:$0xf]
    %v86 = vld [vmem:[%s2 + $0xd4] sm:$0xf]
    %v87 = vld [vmem:[%s2 + $0xd8] sm:$0xf]
    %v88 = vld [vmem:[%s2 + $0xdc] sm:$0xf]
    %v89 = vld [vmem:[%s2 + $0xe0] sm:$0xf]
    %v90 = vld [vmem:[%s2 + $0xe4] sm:$0xf]
    %v91 = vld [vmem:[%s2 + $0xe8] sm:$0xf]
    %v92 = vld [vmem:[%s2 + $0xec] sm:$0xf]
    %v93 = vld [vmem:[%s2 + $0xf0] sm:$0xf]
    %v94 = vld [vmem:[%s2 + $0xf4] sm:$0xf]
    %v95 = vld [vmem:[%s2 + $0xf8] sm:$0xf]
    %v96 = vld [vmem:[%s2 + $0xfc] sm:$0xf]
    %v113 = vunpack.c.l.b16 %v33
    %v114 = vunpack.c.l.b16 %v34
    %v115 = vunpack.c.l.b16 %v35
    %v116 = vunpack.c.l.b16 %v36
    %v117 = vunpack.c.l.b16 %v37
    %v118 = vunpack.c.l.b16 %v38
    %v119 = vunpack.c.l.b16 %v39
    %v120 = vunpack.c.l.b16 %v40
    %v121 = vunpack.c.l.b16 %v41
    %v122 = vunpack.c.l.b16 %v42
    %v123 = vunpack.c.l.b16 %v43
    %v124 = vunpack.c.l.b16 %v44
    %v125 = vunpack.c.l.b16 %v45
    %v126 = vunpack.c.l.b16 %v46
    %v127 = vunpack.c.l.b16 %v47
    %v128 = vunpack.c.l.b16 %v48
    %v129 = vpack.c.b16 %v114, %v113
    %v130 = vpack.c.b16 %v116, %v115
    %v131 = vpack.c.b16 %v118, %v117
    %v132 = vpack.c.b16 %v120, %v119
    %v133 = vpack.c.b16 %v122, %v121
    %v134 = vpack.c.b16 %v124, %v123
    %v135 = vpack.c.b16 %v126, %v125
    %v136 = vpack.c.b16 %v128, %v127
    %145 = vmatprep.subr.bf16.mxu0 0
    %146 = vmatpush1.bf16.msra.mxu0 %v129
    %147 = vmatprep.subr.bf16.mxu0 0
    %148 = vmatpush1.bf16.msra.mxu0 %v130
    %149 = vmatprep.subr.bf16.mxu0 0
    %150 = vmatpush1.bf16.msra.mxu0 %v131
    %151 = vmatprep.subr.bf16.mxu0 0
    %152 = vmatpush1.bf16.msra.mxu0 %v132
    %153 = vmatprep.subr.bf16.mxu0 0
    %154 = vmatpush1.bf16.msra.mxu0 %v133
    %155 = vmatprep.subr.bf16.mxu0 0
    %156 = vmatpush1.bf16.msra.mxu0 %v134
    %157 = vmatprep.subr.bf16.mxu0 0
    %158 = vmatpush1.bf16.msra.mxu0 %v135
    %159 = vmatprep.subr.bf16.mxu0 0
    %160 = vmatpush1.bf16.msra.mxu0 %v136
    %161 = vmatprep.subr.bf16.mxu0 0
    %162 = vmatpush1.bf16.msra.mxu0 0
    %163 = vmatprep.subr.bf16.mxu0 0
    %164 = vmatpush1.bf16.msra.mxu0 0
    %165 = vmatprep.subr.bf16.mxu0 0
    %166 = vmatpush1.bf16.msra.mxu0 0
    %167 = vmatprep.subr.bf16.mxu0 0
    %168 = vmatpush1.bf16.msra.mxu0 0
    %169 = vmatprep.subr.bf16.mxu0 0
    %170 = vmatpush1.bf16.msra.mxu0 0
    %171 = vmatprep.subr.bf16.mxu0 0
    %172 = vmatpush1.bf16.msra.mxu0 0
    %173 = vmatprep.subr.bf16.mxu0 0
    %174 = vmatpush1.bf16.msra.mxu0 0
    %175 = vmatprep.subr.bf16.mxu0 0
    %176 = vmatpush1.bf16.msra.mxu0 0
    %177 = vmatprep.mubr.bf16.mxu0 0
    %178 = vmatmul.mubr.bf16.gmra.mrb[0].mxu0 %v30
    %v179 = vpop.f32.mrb[0].mxu0
    %v180 = vadd.f32 0.0, %v179
    %v181 = vpop.f32.mrb[0].mxu0
    %v182 = vpop.f32.mrb[0].mxu0
    %v183 = vadd.f32 0.0, %v182
    %v184 = vpop.f32.mrb[0].mxu0
    %185 = vdwg.mxu0
    %v202 = vunpack.c.l.b16 %v49
    %v203 = vunpack.c.l.b16 %v50
    %v204 = vunpack.c.l.b16 %v51
    %v205 = vunpack.c.l.b16 %v52
    %v206 = vunpack.c.l.b16 %v53
    %v207 = vunpack.c.l.b16 %v54
    %v208 = vunpack.c.l.b16 %v55
    %v209 = vunpack.c.l.b16 %v56
    %v210 = vunpack.c.l.b16 %v57
    %v211 = vunpack.c.l.b16 %v58
    %v212 = vunpack.c.l.b16 %v59
    %v213 = vunpack.c.l.b16 %v60
    %v214 = vunpack.c.l.b16 %v61
    %v215 = vunpack.c.l.b16 %v62
    %v216 = vunpack.c.l.b16 %v63
    %v217 = vunpack.c.l.b16 %v64
    %v218 = vpack.c.b16 %v203, %v202
    %v219 = vpack.c.b16 %v205, %v204
    %v220 = vpack.c.b16 %v207, %v206
    %v221 = vpack.c.b16 %v209, %v208
    %v222 = vpack.c.b16 %v211, %v210
    %v223 = vpack.c.b16 %v213, %v212
    %v224 = vpack.c.b16 %v215, %v214
    %v225 = vpack.c.b16 %v217, %v216
    %234 = vmatprep.subr.bf16.mxu0 0
    %235 = vmatpush1.bf16.msra.mxu0 %v218
    %236 = vmatprep.subr.bf16.mxu0 0
    %237 = vmatpush1.bf16.msra.mxu0 %v219
    %238 = vmatprep.subr.bf16.mxu0 0
    %239 = vmatpush1.bf16.msra.mxu0 %v220
    %240 = vmatprep.subr.bf16.mxu0 0
    %241 = vmatpush1.bf16.msra.mxu0 %v221
    %242 = vmatprep.subr.bf16.mxu0 0
    %243 = vmatpush1.bf16.msra.mxu0 %v222
    %244 = vmatprep.subr.bf16.mxu0 0
    %245 = vmatpush1.bf16.msra.mxu0 %v223
    %246 = vmatprep.subr.bf16.mxu0 0
    %247 = vmatpush1.bf16.msra.mxu0 %v224
    %248 = vmatprep.subr.bf16.mxu0 0
    %249 = vmatpush1.bf16.msra.mxu0 %v225
    %250 = vmatprep.subr.bf16.mxu0 0
    %251 = vmatpush1.bf16.msra.mxu0 0
    %252 = vmatprep.subr.bf16.mxu0 0
    %253 = vmatpush1.bf16.msra.mxu0 0
    %254 = vmatprep.subr.bf16.mxu0 0
    %255 = vmatpush1.bf16.msra.mxu0 0
    %256 = vmatprep.subr.bf16.mxu0 0
    %257 = vmatpush1.bf16.msra.mxu0 0
    %258 = vmatprep.subr.bf16.mxu0 0
    %259 = vmatpush1.bf16.msra.mxu0 0
    %260 = vmatprep.subr.bf16.mxu0 0
    %261 = vmatpush1.bf16.msra.mxu0 0
    %262 = vmatprep.subr.bf16.mxu0 0
    %263 = vmatpush1.bf16.msra.mxu0 0
    %264 = vmatprep.subr.bf16.mxu0 0
    %265 = vmatpush1.bf16.msra.mxu0 0
    %266 = vmatprep.mubr.bf16.mxu0 0
    %267 = vmatmul.mubr.bf16.gmra.mrb[0].mxu0 %v30
    %v268 = vpop.f32.mrb[0].mxu0
    %v269 = vadd.f32 0.0, %v268
    %v270 = vpop.f32.mrb[0].mxu0
    %v271 = vpop.f32.mrb[0].mxu0
    %v272 = vadd.f32 0.0, %v271
    %v273 = vpop.f32.mrb[0].mxu0
    %274 = vdwg.mxu0
    %v291 = vunpack.c.l.b16 %v65
    %v292 = vunpack.c.l.b16 %v66
    %v293 = vunpack.c.l.b16 %v67
    %v294 = vunpack.c.l.b16 %v68
    %v295 = vunpack.c.l.b16 %v69
    %v296 = vunpack.c.l.b16 %v70
    %v297 = vunpack.c.l.b16 %v71
    %v298 = vunpack.c.l.b16 %v72
    %v299 = vunpack.c.l.b16 %v73
    %v300 = vunpack.c.l.b16 %v74
    %v301 = vunpack.c.l.b16 %v75
    %v302 = vunpack.c.l.b16 %v76
    %v303 = vunpack.c.l.b16 %v77
    %v304 = vunpack.c.l.b16 %v78
    %v305 = vunpack.c.l.b16 %v79
    %v306 = vunpack.c.l.b16 %v80
    %v307 = vpack.c.b16 %v292, %v291
    %v308 = vpack.c.b16 %v294, %v293
    %v309 = vpack.c.b16 %v296, %v295
    %v310 = vpack.c.b16 %v298, %v297
    %v311 = vpack.c.b16 %v300, %v299
    %v312 = vpack.c.b16 %v302, %v301
    %v313 = vpack.c.b16 %v304, %v303
    %v314 = vpack.c.b16 %v306, %v305
    %323 = vmatprep.subr.bf16.mxu0 0
    %324 = vmatpush1.bf16.msra.mxu0 %v307
    %325 = vmatprep.subr.bf16.mxu0 0
    %326 = vmatpush1.bf16.msra.mxu0 %v308
    %327 = vmatprep.subr.bf16.mxu0 0
    %328 = vmatpush1.bf16.msra.mxu0 %v309
    %329 = vmatprep.subr.bf16.mxu0 0
    %330 = vmatpush1.bf16.msra.mxu0 %v310
    %331 = vmatprep.subr.bf16.mxu0 0
    %332 = vmatpush1.bf16.msra.mxu0 %v311
    %333 = vmatprep.subr.bf16.mxu0 0
    %334 = vmatpush1.bf16.msra.mxu0 %v312
    %335 = vmatprep.subr.bf16.mxu0 0
    %336 = vmatpush1.bf16.msra.mxu0 %v313
    %337 = vmatprep.subr.bf16.mxu0 0
    %338 = vmatpush1.bf16.msra.mxu0 %v314
    %339 = vmatprep.subr.bf16.mxu0 0
    %340 = vmatpush1.bf16.msra.mxu0 0
    %341 = vmatprep.subr.bf16.mxu0 0
    %342 = vmatpush1.bf16.msra.mxu0 0
    %343 = vmatprep.subr.bf16.mxu0 0
    %344 = vmatpush1.bf16.msra.mxu0 0
    %345 = vmatprep.subr.bf16.mxu0 0
    %346 = vmatpush1.bf16.msra.mxu0 0
    %347 = vmatprep.subr.bf16.mxu0 0
    %348 = vmatpush1.bf16.msra.mxu0 0
    %349 = vmatprep.subr.bf16.mxu0 0
    %350 = vmatpush1.bf16.msra.mxu0 0
    %351 = vmatprep.subr.bf16.mxu0 0
    %352 = vmatpush1.bf16.msra.mxu0 0
    %353 = vmatprep.subr.bf16.mxu0 0
    %354 = vmatpush1.bf16.msra.mxu0 0
    %355 = vmatprep.mubr.bf16.mxu0 0
    %356 = vmatmul.mubr.bf16.gmra.mrb[0].mxu0 %v30
    %v357 = vpop.f32.mrb[0].mxu0
    %v358 = vadd.f32 0.0, %v357
    %v359 = vpop.f32.mrb[0].mxu0
    %v360 = vpop.f32.mrb[0].mxu0
    %v361 = vadd.f32 0.0, %v360
    %v362 = vpop.f32.mrb[0].mxu0
    %363 = vdwg.mxu0
    %v380 = vunpack.c.l.b16 %v81
    %v381 = vunpack.c.l.b16 %v82
    %v382 = vunpack.c.l.b16 %v83
    %v383 = vunpack.c.l.b16 %v84
    %v384 = vunpack.c.l.b16 %v85
    %v385 = vunpack.c.l.b16 %v86
    %v386 = vunpack.c.l.b16 %v87
    %v387 = vunpack.c.l.b16 %v88
    %v388 = vunpack.c.l.b16 %v89
    %v389 = vunpack.c.l.b16 %v90
    %v390 = vunpack.c.l.b16 %v91
    %v391 = vunpack.c.l.b16 %v92
    %v392 = vunpack.c.l.b16 %v93
    %v393 = vunpack.c.l.b16 %v94
    %v394 = vunpack.c.l.b16 %v95
    %v395 = vunpack.c.l.b16 %v96
    %v396 = vpack.c.b16 %v381, %v380
    %v397 = vpack.c.b16 %v383, %v382
    %v398 = vpack.c.b16 %v385, %v384
    %v399 = vpack.c.b16 %v387, %v386
    %v400 = vpack.c.b16 %v389, %v388
    %v401 = vpack.c.b16 %v391, %v390
    %v402 = vpack.c.b16 %v393, %v392
    %v403 = vpack.c.b16 %v395, %v394
    %412 = vmatprep.subr.bf16.mxu0 0
    %413 = vmatpush1.bf16.msra.mxu0 %v396
    %414 = vmatprep.subr.bf16.mxu0 0
    %415 = vmatpush1.bf16.msra.mxu0 %v397
    %416 = vmatprep.subr.bf16.mxu0 0
    %417 = vmatpush1.bf16.msra.mxu0 %v398
    %418 = vmatprep.subr.bf16.mxu0 0
    %419 = vmatpush1.bf16.msra.mxu0 %v399
    %420 = vmatprep.subr.bf16.mxu0 0
    %421 = vmatpush1.bf16.msra.mxu0 %v400
    %422 = vmatprep.subr.bf16.mxu0 0
    %423 = vmatpush1.bf16.msra.mxu0 %v401
    %424 = vmatprep.subr.bf16.mxu0 0
    %425 = vmatpush1.bf16.msra.mxu0 %v402
    %426 = vmatprep.subr.bf16.mxu0 0
    %427 = vmatpush1.bf16.msra.mxu0 %v403
    %428 = vmatprep.subr.bf16.mxu0 0
    %429 = vmatpush1.bf16.msra.mxu0 0
    %430 = vmatprep.subr.bf16.mxu0 0
    %431 = vmatpush1.bf16.msra.mxu0 0
    %432 = vmatprep.subr.bf16.mxu0 0
    %433 = vmatpush1.bf16.msra.mxu0 0
    %434 = vmatprep.subr.bf16.mxu0 0
    %435 = vmatpush1.bf16.msra.mxu0 0
    %436 = vmatprep.subr.bf16.mxu0 0
    %437 = vmatpush1.bf16.msra.mxu0 0
    %438 = vmatprep.subr.bf16.mxu0 0
    %439 = vmatpush1.bf16.msra.mxu0 0
    %440 = vmatprep.subr.bf16.mxu0 0
    %441 = vmatpush1.bf16.msra.mxu0 0
    %442 = vmatprep.subr.bf16.mxu0 0
    %443 = vmatpush1.bf16.msra.mxu0 0
    %444 = vmatprep.mubr.bf16.mxu0 0
    %445 = vmatmul.mubr.bf16.gmra.mrb[0].mxu0 %v30
    %v446 = vpop.f32.mrb[0].mxu0
    %v447 = vadd.f32 0.0, %v446
    %v448 = vpop.f32.mrb[0].mxu0
    %v449 = vpop.f32.mrb[0].mxu0
    %v450 = vadd.f32 0.0, %v449
    %v451 = vpop.f32.mrb[0].mxu0
    %452 = vdwg.mxu0
    %v453 = vpack.c.bf16 %v183, %v180
    %v454 = vpack.c.bf16 %v272, %v269
    %v455 = vpack.c.bf16 %v361, %v358
    %v456 = vpack.c.bf16 %v450, %v447
    %v461 = vunpack.c.l.b16 %v453
    %v462 = vunpack.c.h.b16 %v453
    %v463 = vunpack.c.l.b16 %v454
    %v464 = vunpack.c.h.b16 %v454
    %v465 = vunpack.c.l.b16 %v455
    %v466 = vunpack.c.h.b16 %v455
    %v467 = vunpack.c.l.b16 %v456
    %v468 = vunpack.c.h.b16 %v456
    %v469 = vpack.c.b16 %v461, %v461
    %v470 = vpack.c.b16 %v462, %v462
    %v471 = vpack.c.b16 %v463, %v463
    %v472 = vpack.c.b16 %v464, %v464
    %v473 = vpack.c.b16 %v465, %v465
    %v474 = vpack.c.b16 %v466, %v466
    %v475 = vpack.c.b16 %v467, %v467
    %v476 = vpack.c.b16 %v468, %v468
    %v477 = vld [vmem:[%s1] sm:$0xff]
    %v478 = vld [vmem:[%s1 + $0x8] sm:$0xff]
    %v479 = vld [vmem:[%s1 + $0x10] sm:$0xff]
    %v480 = vld [vmem:[%s1 + $0x18] sm:$0xff]
    %v481 = vld [vmem:[%s1 + $0x20] sm:$0xff]
    %v482 = vld [vmem:[%s1 + $0x28] sm:$0xff]
    %v483 = vld [vmem:[%s1 + $0x30] sm:$0xff]
    %v484 = vld [vmem:[%s1 + $0x38] sm:$0xff]
    %485 = vrot.lane.b32.xlu0 %v469, 96
    %v486 = vpop.permute.xlu0 %485
    %vm487 = vcmask 261120
    %v489 = vsel %vm487, %v469, 0
    %v492 = vsel %vm487, %v486, 0
    %494 = vmatprep.subr.bf16.mxu0 0
    %495 = vmatpush1.bf16.xpose.msra.mxu0 %v492
    %496 = vmatprep.subr.bf16.mxu0 0
    %497 = vmatpush1.bf16.xpose.msra.mxu0 0
    %498 = vmatprep.subr.bf16.mxu0 0
    %499 = vmatpush1.bf16.xpose.msra.mxu0 0
    %500 = vmatprep.subr.bf16.mxu0 0
    %501 = vmatpush1.bf16.xpose.msra.mxu0 0
    %502 = vmatprep.subr.bf16.mxu0 0
    %503 = vmatpush1.bf16.xpose.msra.mxu0 0
    %504 = vmatprep.subr.bf16.mxu0 0
    %505 = vmatpush1.bf16.xpose.msra.mxu0 0
    %506 = vmatprep.subr.bf16.mxu0 0
    %507 = vmatpush1.bf16.xpose.msra.mxu0 0
    %508 = vmatprep.subr.bf16.mxu0 0
    %509 = vmatpush1.bf16.xpose.msra.mxu0 0
    %510 = vmatprep.subr.bf16.mxu0 0
    %511 = vmatpush1.bf16.xpose.msra.mxu0 0
    %512 = vmatprep.subr.bf16.mxu0 0
    %513 = vmatpush1.bf16.xpose.msra.mxu0 0
    %514 = vmatprep.subr.bf16.mxu0 0
    %515 = vmatpush1.bf16.xpose.msra.mxu0 0
    %516 = vmatprep.subr.bf16.mxu0 0
    %517 = vmatpush1.bf16.xpose.msra.mxu0 0
    %518 = vmatprep.subr.bf16.mxu0 0
    %519 = vmatpush1.bf16.xpose.msra.mxu0 0
    %520 = vmatprep.subr.bf16.mxu0 0
    %521 = vmatpush1.bf16.xpose.msra.mxu0 0
    %522 = vmatprep.subr.bf16.mxu0 0
    %523 = vmatpush1.bf16.xpose.msra.mxu0 0
    %524 = vmatprep.subr.bf16.mxu0 0
    %525 = vmatpush1.bf16.xpose.msra.mxu0 0
    %526 = vmatprep.mubr.bf16.mxu0 0
    %527 = vmatmul.mubr.bf16.gmra.mrb[0].mxu0 %v489
    %v528 = vpop.f32.mrb[0].mxu0
    %v529 = vadd.f32 %v477, %v528
    %v530 = vpop.f32.mrb[0].mxu0
    %v531 = vpop.f32.mrb[0].mxu0
    %v532 = vpop.f32.mrb[0].mxu0
    %533 = vdwg.mxu0
    %534 = vrot.lane.b32.xlu0 %v470, 96
    %v535 = vpop.permute.xlu0 %534
    %v537 = vsel %vm487, %v470, 0
    %v540 = vsel %vm487, %v535, 0
    %542 = vmatprep.subr.bf16.mxu0 0
    %543 = vmatpush1.bf16.xpose.msra.mxu0 %v540
    %544 = vmatprep.subr.bf16.mxu0 0
    %545 = vmatpush1.bf16.xpose.msra.mxu0 0
    %546 = vmatprep.subr.bf16.mxu0 0
    %547 = vmatpush1.bf16.xpose.msra.mxu0 0
    %548 = vmatprep.subr.bf16.mxu0 0
    %549 = vmatpush1.bf16.xpose.msra.mxu0 0
    %550 = vmatprep.subr.bf16.mxu0 0
    %551 = vmatpush1.bf16.xpose.msra.mxu0 0
    %552 = vmatprep.subr.bf16.mxu0 0
    %553 = vmatpush1.bf16.xpose.msra.mxu0 0
    %554 = vmatprep.subr.bf16.mxu0 0
    %555 = vmatpush1.bf16.xpose.msra.mxu0 0
    %556 = vmatprep.subr.bf16.mxu0 0
    %557 = vmatpush1.bf16.xpose.msra.mxu0 0
    %558 = vmatprep.subr.bf16.mxu0 0
    %559 = vmatpush1.bf16.xpose.msra.mxu0 0
    %560 = vmatprep.subr.bf16.mxu0 0
    %561 = vmatpush1.bf16.xpose.msra.mxu0 0
    %562 = vmatprep.subr.bf16.mxu0 0
    %563 = vmatpush1.bf16.xpose.msra.mxu0 0
    %564 = vmatprep.subr.bf16.mxu0 0
    %565 = vmatpush1.bf16.xpose.msra.mxu0 0
    %566 = vmatprep.subr.bf16.mxu0 0
    %567 = vmatpush1.bf16.xpose.msra.mxu0 0
    %568 = vmatprep.subr.bf16.mxu0 0
    %569 = vmatpush1.bf16.xpose.msra.mxu0 0
    %570 = vmatprep.subr.bf16.mxu0 0
    %571 = vmatpush1.bf16.xpose.msra.mxu0 0
    %572 = vmatprep.subr.bf16.mxu0 0
    %573 = vmatpush1.bf16.xpose.msra.mxu0 0
    %574 = vmatprep.mubr.bf16.mxu0 0
    %575 = vmatmul.mubr.bf16.gmra.mrb[0].mxu0 %v537
    %v576 = vpop.f32.mrb[0].mxu0
    %v577 = vadd.f32 %v478, %v576
    %v578 = vpop.f32.mrb[0].mxu0
    %v579 = vpop.f32.mrb[0].mxu0
    %v580 = vpop.f32.mrb[0].mxu0
    %581 = vdwg.mxu0
    %582 = vrot.lane.b32.xlu0 %v471, 96
    %v583 = vpop.permute.xlu0 %582
    %v585 = vsel %vm487, %v471, 0
    %v588 = vsel %vm487, %v583, 0
    %590 = vmatprep.subr.bf16.mxu0 0
    %591 = vmatpush1.bf16.xpose.msra.mxu0 %v588
    %592 = vmatprep.subr.bf16.mxu0 0
    %593 = vmatpush1.bf16.xpose.msra.mxu0 0
    %594 = vmatprep.subr.bf16.mxu0 0
    %595 = vmatpush1.bf16.xpose.msra.mxu0 0
    %596 = vmatprep.subr.bf16.mxu0 0
    %597 = vmatpush1.bf16.xpose.msra.mxu0 0
    %598 = vmatprep.subr.bf16.mxu0 0
    %599 = vmatpush1.bf16.xpose.msra.mxu0 0
    %600 = vmatprep.subr.bf16.mxu0 0
    %601 = vmatpush1.bf16.xpose.msra.mxu0 0
    %602 = vmatprep.subr.bf16.mxu0 0
    %603 = vmatpush1.bf16.xpose.msra.mxu0 0
    %604 = vmatprep.subr.bf16.mxu0 0
    %605 = vmatpush1.bf16.xpose.msra.mxu0 0
    %606 = vmatprep.subr.bf16.mxu0 0
    %607 = vmatpush1.bf16.xpose.msra.mxu0 0
    %608 = vmatprep.subr.bf16.mxu0 0
    %609 = vmatpush1.bf16.xpose.msra.mxu0 0
    %610 = vmatprep.subr.bf16.mxu0 0
    %611 = vmatpush1.bf16.xpose.msra.mxu0 0
    %612 = vmatprep.subr.bf16.mxu0 0
    %613 = vmatpush1.bf16.xpose.msra.mxu0 0
    %614 = vmatprep.subr.bf16.mxu0 0
    %615 = vmatpush1.bf16.xpose.msra.mxu0 0
    %616 = vmatprep.subr.bf16.mxu0 0
    %617 = vmatpush1.bf16.xpose.msra.mxu0 0
    %618 = vmatprep.subr.bf16.mxu0 0
    %619 = vmatpush1.bf16.xpose.msra.mxu0 0
    %620 = vmatprep.subr.bf16.mxu0 0
    %621 = vmatpush1.bf16.xpose.msra.mxu0 0
    %622 = vmatprep.mubr.bf16.mxu0 0
    %623 = vmatmul.mubr.bf16.gmra.mrb[0].mxu0 %v585
    %v624 = vpop.f32.mrb[0].mxu0
    %v625 = vadd.f32 %v479, %v624
    %v626 = vpop.f32.mrb[0].mxu0
    %v627 = vpop.f32.mrb[0].mxu0
    %v628 = vpop.f32.mrb[0].mxu0
    %629 = vdwg.mxu0
    %630 = vrot.lane.b32.xlu0 %v472, 96
    %v631 = vpop.permute.xlu0 %630
    %v633 = vsel %vm487, %v472, 0
    %v636 = vsel %vm487, %v631, 0
    %638 = vmatprep.subr.bf16.mxu0 0
    %639 = vmatpush1.bf16.xpose.msra.mxu0 %v636
    %640 = vmatprep.subr.bf16.mxu0 0
    %641 = vmatpush1.bf16.xpose.msra.mxu0 0
    %642 = vmatprep.subr.bf16.mxu0 0
    %643 = vmatpush1.bf16.xpose.msra.mxu0 0
    %644 = vmatprep.subr.bf16.mxu0 0
    %645 = vmatpush1.bf16.xpose.msra.mxu0 0
    %646 = vmatprep.subr.bf16.mxu0 0
    %647 = vmatpush1.bf16.xpose.msra.mxu0 0
    %648 = vmatprep.subr.bf16.mxu0 0
    %649 = vmatpush1.bf16.xpose.msra.mxu0 0
    %650 = vmatprep.subr.bf16.mxu0 0
    %651 = vmatpush1.bf16.xpose.msra.mxu0 0
    %652 = vmatprep.subr.bf16.mxu0 0
    %653 = vmatpush1.bf16.xpose.msra.mxu0 0
    %654 = vmatprep.subr.bf16.mxu0 0
    %655 = vmatpush1.bf16.xpose.msra.mxu0 0
    %656 = vmatprep.subr.bf16.mxu0 0
    %657 = vmatpush1.bf16.xpose.msra.mxu0 0
    %658 = vmatprep.subr.bf16.mxu0 0
    %659 = vmatpush1.bf16.xpose.msra.mxu0 0
    %660 = vmatprep.subr.bf16.mxu0 0
    %661 = vmatpush1.bf16.xpose.msra.mxu0 0
    %662 = vmatprep.subr.bf16.mxu0 0
    %663 = vmatpush1.bf16.xpose.msra.mxu0 0
    %664 = vmatprep.subr.bf16.mxu0 0
    %665 = vmatpush1.bf16.xpose.msra.mxu0 0
    %666 = vmatprep.subr.bf16.mxu0 0
    %667 = vmatpush1.bf16.xpose.msra.mxu0 0
    %668 = vmatprep.subr.bf16.mxu0 0
    %669 = vmatpush1.bf16.xpose.msra.mxu0 0
    %670 = vmatprep.mubr.bf16.mxu0 0
    %671 = vmatmul.mubr.bf16.gmra.mrb[0].mxu0 %v633
    %v672 = vpop.f32.mrb[0].mxu0
    %v673 = vadd.f32 %v480, %v672
    %v674 = vpop.f32.mrb[0].mxu0
    %v675 = vpop.f32.mrb[0].mxu0
    %v676 = vpop.f32.mrb[0].mxu0
    %677 = vdwg.mxu0
    %678 = vrot.lane.b32.xlu0 %v473, 96
    %v679 = vpop.permute.xlu0 %678
    %v681 = vsel %vm487, %v473, 0
    %v684 = vsel %vm487, %v679, 0
    %686 = vmatprep.subr.bf16.mxu0 0
    %687 = vmatpush1.bf16.xpose.msra.mxu0 %v684
    %688 = vmatprep.subr.bf16.mxu0 0
    %689 = vmatpush1.bf16.xpose.msra.mxu0 0
    %690 = vmatprep.subr.bf16.mxu0 0
    %691 = vmatpush1.bf16.xpose.msra.mxu0 0
    %692 = vmatprep.subr.bf16.mxu0 0
    %693 = vmatpush1.bf16.xpose.msra.mxu0 0
    %694 = vmatprep.subr.bf16.mxu0 0
    %695 = vmatpush1.bf16.xpose.msra.mxu0 0
    %696 = vmatprep.subr.bf16.mxu0 0
    %697 = vmatpush1.bf16.xpose.msra.mxu0 0
    %698 = vmatprep.subr.bf16.mxu0 0
    %699 = vmatpush1.bf16.xpose.msra.mxu0 0
    %700 = vmatprep.subr.bf16.mxu0 0
    %701 = vmatpush1.bf16.xpose.msra.mxu0 0
    %702 = vmatprep.subr.bf16.mxu0 0
    %703 = vmatpush1.bf16.xpose.msra.mxu0 0
    %704 = vmatprep.subr.bf16.mxu0 0
    %705 = vmatpush1.bf16.xpose.msra.mxu0 0
    %706 = vmatprep.subr.bf16.mxu0 0
    %707 = vmatpush1.bf16.xpose.msra.mxu0 0
    %708 = vmatprep.subr.bf16.mxu0 0
    %709 = vmatpush1.bf16.xpose.msra.mxu0 0
    %710 = vmatprep.subr.bf16.mxu0 0
    %711 = vmatpush1.bf16.xpose.msra.mxu0 0
    %712 = vmatprep.subr.bf16.mxu0 0
    %713 = vmatpush1.bf16.xpose.msra.mxu0 0
    %714 = vmatprep.subr.bf16.mxu0 0
    %715 = vmatpush1.bf16.xpose.msra.mxu0 0
    %716 = vmatprep.subr.bf16.mxu0 0
    %717 = vmatpush1.bf16.xpose.msra.mxu0 0
    %718 = vmatprep.mubr.bf16.mxu0 0
    %719 = vmatmul.mubr.bf16.gmra.mrb[0].mxu0 %v681
    %v720 = vpop.f32.mrb[0].mxu0
    %v721 = vadd.f32 %v481, %v720
    %v722 = vpop.f32.mrb[0].mxu0
    %v723 = vpop.f32.mrb[0].mxu0
    %v724 = vpop.f32.mrb[0].mxu0
    %725 = vdwg.mxu0
    %726 = vrot.lane.b32.xlu0 %v474, 96
    %v727 = vpop.permute.xlu0 %726
    %v729 = vsel %vm487, %v474, 0
    %v732 = vsel %vm487, %v727, 0
    %734 = vmatprep.subr.bf16.mxu0 0
    %735 = vmatpush1.bf16.xpose.msra.mxu0 %v732
    %736 = vmatprep.subr.bf16.mxu0 0
    %737 = vmatpush1.bf16.xpose.msra.mxu0 0
    %738 = vmatprep.subr.bf16.mxu0 0
    %739 = vmatpush1.bf16.xpose.msra.mxu0 0
    %740 = vmatprep.subr.bf16.mxu0 0
    %741 = vmatpush1.bf16.xpose.msra.mxu0 0
    %742 = vmatprep.subr.bf16.mxu0 0
    %743 = vmatpush1.bf16.xpose.msra.mxu0 0
    %744 = vmatprep.subr.bf16.mxu0 0
    %745 = vmatpush1.bf16.xpose.msra.mxu0 0
    %746 = vmatprep.subr.bf16.mxu0 0
    %747 = vmatpush1.bf16.xpose.msra.mxu0 0
    %748 = vmatprep.subr.bf16.mxu0 0
    %749 = vmatpush1.bf16.xpose.msra.mxu0 0
    %750 = vmatprep.subr.bf16.mxu0 0
    %751 = vmatpush1.bf16.xpose.msra.mxu0 0
    %752 = vmatprep.subr.bf16.mxu0 0
    %753 = vmatpush1.bf16.xpose.msra.mxu0 0
    %754 = vmatprep.subr.bf16.mxu0 0
    %755 = vmatpush1.bf16.xpose.msra.mxu0 0
    %756 = vmatprep.subr.bf16.mxu0 0
    %757 = vmatpush1.bf16.xpose.msra.mxu0 0
    %758 = vmatprep.subr.bf16.mxu0 0
    %759 = vmatpush1.bf16.xpose.msra.mxu0 0
    %760 = vmatprep.subr.bf16.mxu0 0
    %761 = vmatpush1.bf16.xpose.msra.mxu0 0
    %762 = vmatprep.subr.bf16.mxu0 0
    %763 = vmatpush1.bf16.xpose.msra.mxu0 0
    %764 = vmatprep.subr.bf16.mxu0 0
    %765 = vmatpush1.bf16.xpose.msra.mxu0 0
    %766 = vmatprep.mubr.bf16.mxu0 0
    %767 = vmatmul.mubr.bf16.gmra.mrb[0].mxu0 %v729
    %v768 = vpop.f32.mrb[0].mxu0
    %v769 = vadd.f32 %v482, %v768
    %v770 = vpop.f32.mrb[0].mxu0
    %v771 = vpop.f32.mrb[0].mxu0
    %v772 = vpop.f32.mrb[0].mxu0
    %773 = vdwg.mxu0
    %774 = vrot.lane.b32.xlu0 %v475, 96
    %v775 = vpop.permute.xlu0 %774
    %v777 = vsel %vm487, %v475, 0
    %v780 = vsel %vm487, %v775, 0
    %782 = vmatprep.subr.bf16.mxu0 0
    %783 = vmatpush1.bf16.xpose.msra.mxu0 %v780
    %784 = vmatprep.subr.bf16.mxu0 0
    %785 = vmatpush1.bf16.xpose.msra.mxu0 0
    %786 = vmatprep.subr.bf16.mxu0 0
    %787 = vmatpush1.bf16.xpose.msra.mxu0 0
    %788 = vmatprep.subr.bf16.mxu0 0
    %789 = vmatpush1.bf16.xpose.msra.mxu0 0
    %790 = vmatprep.subr.bf16.mxu0 0
    %791 = vmatpush1.bf16.xpose.msra.mxu0 0
    %792 = vmatprep.subr.bf16.mxu0 0
    %793 = vmatpush1.bf16.xpose.msra.mxu0 0
    %794 = vmatprep.subr.bf16.mxu0 0
    %795 = vmatpush1.bf16.xpose.msra.mxu0 0
    %796 = vmatprep.subr.bf16.mxu0 0
    %797 = vmatpush1.bf16.xpose.msra.mxu0 0
    %798 = vmatprep.subr.bf16.mxu0 0
    %799 = vmatpush1.bf16.xpose.msra.mxu0 0
    %800 = vmatprep.subr.bf16.mxu0 0
    %801 = vmatpush1.bf16.xpose.msra.mxu0 0
    %802 = vmatprep.subr.bf16.mxu0 0
    %803 = vmatpush1.bf16.xpose.msra.mxu0 0
    %804 = vmatprep.subr.bf16.mxu0 0
    %805 = vmatpush1.bf16.xpose.msra.mxu0 0
    %806 = vmatprep.subr.bf16.mxu0 0
    %807 = vmatpush1.bf16.xpose.msra.mxu0 0
    %808 = vmatprep.subr.bf16.mxu0 0
    %809 = vmatpush1.bf16.xpose.msra.mxu0 0
    %810 = vmatprep.subr.bf16.mxu0 0
    %811 = vmatpush1.bf16.xpose.msra.mxu0 0
    %812 = vmatprep.subr.bf16.mxu0 0
    %813 = vmatpush1.bf16.xpose.msra.mxu0 0
    %814 = vmatprep.mubr.bf16.mxu0 0
    %815 = vmatmul.mubr.bf16.gmra.mrb[0].mxu0 %v777
    %v816 = vpop.f32.mrb[0].mxu0
    %v817 = vadd.f32 %v483, %v816
    %v818 = vpop.f32.mrb[0].mxu0
    %v819 = vpop.f32.mrb[0].mxu0
    %v820 = vpop.f32.mrb[0].mxu0
    %821 = vdwg.mxu0
    %822 = vrot.lane.b32.xlu0 %v476, 96
    %v823 = vpop.permute.xlu0 %822
    %v825 = vsel %vm487, %v476, 0
    %v828 = vsel %vm487, %v823, 0
    %830 = vmatprep.subr.bf16.mxu0 0
    %831 = vmatpush1.bf16.xpose.msra.mxu0 %v828
    %832 = vmatprep.subr.bf16.mxu0 0
    %833 = vmatpush1.bf16.xpose.msra.mxu0 0
    %834 = vmatprep.subr.bf16.mxu0 0
    %835 = vmatpush1.bf16.xpose.msra.mxu0 0
    %836 = vmatprep.subr.bf16.mxu0 0
    %837 = vmatpush1.bf16.xpose.msra.mxu0 0
    %838 = vmatprep.subr.bf16.mxu0 0
    %839 = vmatpush1.bf16.xpose.msra.mxu0 0
    %840 = vmatprep.subr.bf16.mxu0 0
    %841 = vmatpush1.bf16.xpose.msra.mxu0 0
    %842 = vmatprep.subr.bf16.mxu0 0
    %843 = vmatpush1.bf16.xpose.msra.mxu0 0
    %844 = vmatprep.subr.bf16.mxu0 0
    %845 = vmatpush1.bf16.xpose.msra.mxu0 0
    %846 = vmatprep.subr.bf16.mxu0 0
    %847 = vmatpush1.bf16.xpose.msra.mxu0 0
    %848 = vmatprep.subr.bf16.mxu0 0
    %849 = vmatpush1.bf16.xpose.msra.mxu0 0
    %850 = vmatprep.subr.bf16.mxu0 0
    %851 = vmatpush1.bf16.xpose.msra.mxu0 0
    %852 = vmatprep.subr.bf16.mxu0 0
    %853 = vmatpush1.bf16.xpose.msra.mxu0 0
    %854 = vmatprep.subr.bf16.mxu0 0
    %855 = vmatpush1.bf16.xpose.msra.mxu0 0
    %856 = vmatprep.subr.bf16.mxu0 0
    %857 = vmatpush1.bf16.xpose.msra.mxu0 0
    %858 = vmatprep.subr.bf16.mxu0 0
    %859 = vmatpush1.bf16.xpose.msra.mxu0 0
    %860 = vmatprep.subr.bf16.mxu0 0
    %861 = vmatpush1.bf16.xpose.msra.mxu0 0
    %862 = vmatprep.mubr.bf16.mxu0 0
    %863 = vmatmul.mubr.bf16.gmra.mrb[0].mxu0 %v825
    %v864 = vpop.f32.mrb[0].mxu0
    %v865 = vadd.f32 %v484, %v864
    %v866 = vpop.f32.mrb[0].mxu0
    %v867 = vpop.f32.mrb[0].mxu0
    %v868 = vpop.f32.mrb[0].mxu0
    %869 = vdwg.mxu0
    %vm870 = vcmask 64512
    %v871 = vsel %vm870, %v529, -inf
    %872 = vmax.xlane.f32.xlu0 %v871
    %v873 = vpop.xlane.xlu0 %872
    %v874 = vsel %vm870, %v577, -inf
    %875 = vmax.xlane.f32.xlu0 %v874
    %v876 = vpop.xlane.xlu0 %875
    %v877 = vsel %vm870, %v625, -inf
    %878 = vmax.xlane.f32.xlu0 %v877
    %v879 = vpop.xlane.xlu0 %878
    %v880 = vsel %vm870, %v673, -inf
    %881 = vmax.xlane.f32.xlu0 %v880
    %v882 = vpop.xlane.xlu0 %881
    %v883 = vsel %vm870, %v721, -inf
    %884 = vmax.xlane.f32.xlu0 %v883
    %v885 = vpop.xlane.xlu0 %884
    %v886 = vsel %vm870, %v769, -inf
    %887 = vmax.xlane.f32.xlu0 %v886
    %v888 = vpop.xlane.xlu0 %887
    %v889 = vsel %vm870, %v817, -inf
    %890 = vmax.xlane.f32.xlu0 %v889
    %v891 = vpop.xlane.xlu0 %890
    %v892 = vsel %vm870, %v865, -inf
    %893 = vmax.xlane.f32.xlu0 %v892
    %v894 = vpop.xlane.xlu0 %893
    %v895 = vsub.f32 %v529, %v873
    %v896 = vsub.f32 %v577, %v876
    %v897 = vsub.f32 %v625, %v879
    %v898 = vsub.f32 %v673, %v882
    %v899 = vsub.f32 %v721, %v885
    %v900 = vsub.f32 %v769, %v888
    %v901 = vsub.f32 %v817, %v891
    %v902 = vsub.f32 %v865, %v894
    %v903 = vmul.f32 %v895, 1.442695
    %v904 = vpow.pop %v903
    %v905 = vmul.f32 %v896, 1.442695
    %v906 = vpow.pop %v905
    %v907 = vmul.f32 %v897, 1.442695
    %v908 = vpow.pop %v907
    %v909 = vmul.f32 %v898, 1.442695
    %v910 = vpow.pop %v909
    %v911 = vmul.f32 %v899, 1.442695
    %v912 = vpow.pop %v911
    %v913 = vmul.f32 %v900, 1.442695
    %v914 = vpow.pop %v913
    %v915 = vmul.f32 %v901, 1.442695
    %v916 = vpow.pop %v915
    %v917 = vmul.f32 %v902, 1.442695
    %v918 = vpow.pop %v917
    %v919 = vsel %vm870, %v904, 0.0
    %920 = vadd.xlane.f32.xlu0 %v919
    %v921 = vpop.xlane.xlu0 %920
    %v922 = vsel %vm870, %v906, 0.0
    %923 = vadd.xlane.f32.xlu0 %v922
    %v924 = vpop.xlane.xlu0 %923
    %v925 = vsel %vm870, %v908, 0.0
    %926 = vadd.xlane.f32.xlu0 %v925
    %v927 = vpop.xlane.xlu0 %926
    %v928 = vsel %vm870, %v910, 0.0
    %929 = vadd.xlane.f32.xlu0 %v928
    %v930 = vpop.xlane.xlu0 %929
    %v931 = vsel %vm870, %v912, 0.0
    %932 = vadd.xlane.f32.xlu0 %v931
    %v933 = vpop.xlane.xlu0 %932
    %v934 = vsel %vm870, %v914, 0.0
    %935 = vadd.xlane.f32.xlu0 %v934
    %v936 = vpop.xlane.xlu0 %935
    %v937 = vsel %vm870, %v916, 0.0
    %938 = vadd.xlane.f32.xlu0 %v937
    %v939 = vpop.xlane.xlu0 %938
    %v940 = vsel %vm870, %v918, 0.0
    %941 = vadd.xlane.f32.xlu0 %v940
    %v942 = vpop.xlane.xlu0 %941
    %v943 = vrcp.pop %v921
    %v944 = vrcp.pop %v924
    %v945 = vrcp.pop %v927
    %v946 = vrcp.pop %v930
    %v947 = vrcp.pop %v933
    %v948 = vrcp.pop %v936
    %v949 = vrcp.pop %v939
    %v950 = vrcp.pop %v942
    %v951 = vmul.f32 %v904, %v943
    %v952 = vmul.f32 %v906, %v944
    %v953 = vmul.f32 %v908, %v945
    %v954 = vmul.f32 %v910, %v946
    %v955 = vmul.f32 %v912, %v947
    %v956 = vmul.f32 %v914, %v948
    %v957 = vmul.f32 %v916, %v949
    %v958 = vmul.f32 %v918, %v950
    %v959 = vpack.c.bf16 %v951, %v951
    %v960 = vpack.c.bf16 %v952, %v952
    %v961 = vpack.c.bf16 %v953, %v953
    %v962 = vpack.c.bf16 %v954, %v954
    %v963 = vpack.c.bf16 %v955, %v955
    %v964 = vpack.c.bf16 %v956, %v956
    %v965 = vpack.c.bf16 %v957, %v957
    %v966 = vpack.c.bf16 %v958, %v958
    %967 = vrot.lane.b32.xlu0 %v469, 64
    %v968 = vpop.permute.xlu0 %967
    %v970 = vsel %vm870, %v959, 0
    %vm972 = vcmask 1043456
    %v974 = vsel %vm972, %v968, 0
    %976 = vmatprep.subr.bf16.mxu0 0
    %977 = vmatpush1.bf16.msra.mxu0 %v974
    %978 = vmatprep.subr.bf16.mxu0 0
    %979 = vmatpush1.bf16.msra.mxu0 0
    %980 = vmatprep.subr.bf16.mxu0 0
    %981 = vmatpush1.bf16.msra.mxu0 0
    %982 = vmatprep.subr.bf16.mxu0 0
    %983 = vmatpush1.bf16.msra.mxu0 0
    %984 = vmatprep.subr.bf16.mxu0 0
    %985 = vmatpush1.bf16.msra.mxu0 0
    %986 = vmatprep.subr.bf16.mxu0 0
    %987 = vmatpush1.bf16.msra.mxu0 0
    %988 = vmatprep.subr.bf16.mxu0 0
    %989 = vmatpush1.bf16.msra.mxu0 0
    %990 = vmatprep.subr.bf16.mxu0 0
    %991 = vmatpush1.bf16.msra.mxu0 0
    %992 = vmatprep.subr.bf16.mxu0 0
    %993 = vmatpush1.bf16.msra.mxu0 0
    %994 = vmatprep.subr.bf16.mxu0 0
    %995 = vmatpush1.bf16.msra.mxu0 0
    %996 = vmatprep.subr.bf16.mxu0 0
    %997 = vmatpush1.bf16.msra.mxu0 0
    %998 = vmatprep.subr.bf16.mxu0 0
    %999 = vmatpush1.bf16.msra.mxu0 0
    %1000 = vmatprep.subr.bf16.mxu0 0
    %1001 = vmatpush1.bf16.msra.mxu0 0
    %1002 = vmatprep.subr.bf16.mxu0 0
    %1003 = vmatpush1.bf16.msra.mxu0 0
    %1004 = vmatprep.subr.bf16.mxu0 0
    %1005 = vmatpush1.bf16.msra.mxu0 0
    %1006 = vmatprep.subr.bf16.mxu0 0
    %1007 = vmatpush1.bf16.msra.mxu0 0
    %1008 = vmatprep.mubr.bf16.mxu0 0
    %1009 = vmatmul.mubr.bf16.gmra.mrb[0].mxu0 %v970
    %v1010 = vpop.f32.mrb[0].mxu0
    %v1011 = vadd.f32 0.0, %v1010
    %v1012 = vpop.f32.mrb[0].mxu0
    %v1013 = vpop.f32.mrb[0].mxu0
    %v1014 = vpop.f32.mrb[0].mxu0
    %1015 = vdwg.mxu0
    %1016 = vrot.lane.b32.xlu0 %v470, 64
    %v1017 = vpop.permute.xlu0 %1016
    %v1019 = vsel %vm870, %v960, 0
    %v1022 = vsel %vm972, %v1017, 0
    %1024 = vmatprep.subr.bf16.mxu0 0
    %1025 = vmatpush1.bf16.msra.mxu0 %v1022
    %1026 = vmatprep.subr.bf16.mxu0 0
    %1027 = vmatpush1.bf16.msra.mxu0 0
    %1028 = vmatprep.subr.bf16.mxu0 0
    %1029 = vmatpush1.bf16.msra.mxu0 0
    %1030 = vmatprep.subr.bf16.mxu0 0
    %1031 = vmatpush1.bf16.msra.mxu0 0
    %1032 = vmatprep.subr.bf16.mxu0 0
    %1033 = vmatpush1.bf16.msra.mxu0 0
    %1034 = vmatprep.subr.bf16.mxu0 0
    %1035 = vmatpush1.bf16.msra.mxu0 0
    %1036 = vmatprep.subr.bf16.mxu0 0
    %1037 = vmatpush1.bf16.msra.mxu0 0
    %1038 = vmatprep.subr.bf16.mxu0 0
    %1039 = vmatpush1.bf16.msra.mxu0 0
    %1040 = vmatprep.subr.bf16.mxu0 0
    %1041 = vmatpush1.bf16.msra.mxu0 0
    %1042 = vmatprep.subr.bf16.mxu0 0
    %1043 = vmatpush1.bf16.msra.mxu0 0
    %1044 = vmatprep.subr.bf16.mxu0 0
    %1045 = vmatpush1.bf16.msra.mxu0 0
    %1046 = vmatprep.subr.bf16.mxu0 0
    %1047 = vmatpush1.bf16.msra.mxu0 0
    %1048 = vmatprep.subr.bf16.mxu0 0
    %1049 = vmatpush1.bf16.msra.mxu0 0
    %1050 = vmatprep.subr.bf16.mxu0 0
    %1051 = vmatpush1.bf16.msra.mxu0 0
    %1052 = vmatprep.subr.bf16.mxu0 0
    %1053 = vmatpush1.bf16.msra.mxu0 0
    %1054 = vmatprep.subr.bf16.mxu0 0
    %1055 = vmatpush1.bf16.msra.mxu0 0
    %1056 = vmatprep.mubr.bf16.mxu0 0
    %1057 = vmatmul.mubr.bf16.gmra.mrb[0].mxu0 %v1019
    %v1058 = vpop.f32.mrb[0].mxu0
    %v1059 = vadd.f32 0.0, %v1058
    %v1060 = vpop.f32.mrb[0].mxu0
    %v1061 = vpop.f32.mrb[0].mxu0
    %v1062 = vpop.f32.mrb[0].mxu0
    %1063 = vdwg.mxu0
    %1064 = vrot.lane.b32.xlu0 %v471, 64
    %v1065 = vpop.permute.xlu0 %1064
    %v1067 = vsel %vm870, %v961, 0
    %v1070 = vsel %vm972, %v1065, 0
    %1072 = vmatprep.subr.bf16.mxu0 0
    %1073 = vmatpush1.bf16.msra.mxu0 %v1070
    %1074 = vmatprep.subr.bf16.mxu0 0
    %1075 = vmatpush1.bf16.msra.mxu0 0
    %1076 = vmatprep.subr.bf16.mxu0 0
    %1077 = vmatpush1.bf16.msra.mxu0 0
    %1078 = vmatprep.subr.bf16.mxu0 0
    %1079 = vmatpush1.bf16.msra.mxu0 0
    %1080 = vmatprep.subr.bf16.mxu0 0
    %1081 = vmatpush1.bf16.msra.mxu0 0
    %1082 = vmatprep.subr.bf16.mxu0 0
    %1083 = vmatpush1.bf16.msra.mxu0 0
    %1084 = vmatprep.subr.bf16.mxu0 0
    %1085 = vmatpush1.bf16.msra.mxu0 0
    %1086 = vmatprep.subr.bf16.mxu0 0
    %1087 = vmatpush1.bf16.msra.mxu0 0
    %1088 = vmatprep.subr.bf16.mxu0 0
    %1089 = vmatpush1.bf16.msra.mxu0 0
    %1090 = vmatprep.subr.bf16.mxu0 0
    %1091 = vmatpush1.bf16.msra.mxu0 0
    %1092 = vmatprep.subr.bf16.mxu0 0
    %1093 = vmatpush1.bf16.msra.mxu0 0
    %1094 = vmatprep.subr.bf16.mxu0 0
    %1095 = vmatpush1.bf16.msra.mxu0 0
    %1096 = vmatprep.subr.bf16.mxu0 0
    %1097 = vmatpush1.bf16.msra.mxu0 0
    %1098 = vmatprep.subr.bf16.mxu0 0
    %1099 = vmatpush1.bf16.msra.mxu0 0
    %1100 = vmatprep.subr.bf16.mxu0 0
    %1101 = vmatpush1.bf16.msra.mxu0 0
    %1102 = vmatprep.subr.bf16.mxu0 0
    %1103 = vmatpush1.bf16.msra.mxu0 0
    %1104 = vmatprep.mubr.bf16.mxu0 0
    %1105 = vmatmul.mubr.bf16.gmra.mrb[0].mxu0 %v1067
    %v1106 = vpop.f32.mrb[0].mxu0
    %v1107 = vadd.f32 0.0, %v1106
    %v1108 = vpop.f32.mrb[0].mxu0
    %v1109 = vpop.f32.mrb[0].mxu0
    %v1110 = vpop.f32.mrb[0].mxu0
    %1111 = vdwg.mxu0
    %1112 = vrot.lane.b32.xlu0 %v472, 64
    %v1113 = vpop.permute.xlu0 %1112
    %v1115 = vsel %vm870, %v962, 0
    %v1118 = vsel %vm972, %v1113, 0
    %1120 = vmatprep.subr.bf16.mxu0 0
    %1121 = vmatpush1.bf16.msra.mxu0 %v1118
    %1122 = vmatprep.subr.bf16.mxu0 0
    %1123 = vmatpush1.bf16.msra.mxu0 0
    %1124 = vmatprep.subr.bf16.mxu0 0
    %1125 = vmatpush1.bf16.msra.mxu0 0
    %1126 = vmatprep.subr.bf16.mxu0 0
    %1127 = vmatpush1.bf16.msra.mxu0 0
    %1128 = vmatprep.subr.bf16.mxu0 0
    %1129 = vmatpush1.bf16.msra.mxu0 0
    %1130 = vmatprep.subr.bf16.mxu0 0
    %1131 = vmatpush1.bf16.msra.mxu0 0
    %1132 = vmatprep.subr.bf16.mxu0 0
    %1133 = vmatpush1.bf16.msra.mxu0 0
    %1134 = vmatprep.subr.bf16.mxu0 0
    %1135 = vmatpush1.bf16.msra.mxu0 0
    %1136 = vmatprep.subr.bf16.mxu0 0
    %1137 = vmatpush1.bf16.msra.mxu0 0
    %1138 = vmatprep.subr.bf16.mxu0 0
    %1139 = vmatpush1.bf16.msra.mxu0 0
    %1140 = vmatprep.subr.bf16.mxu0 0
    %1141 = vmatpush1.bf16.msra.mxu0 0
    %1142 = vmatprep.subr.bf16.mxu0 0
    %1143 = vmatpush1.bf16.msra.mxu0 0
    %1144 = vmatprep.subr.bf16.mxu0 0
    %1145 = vmatpush1.bf16.msra.mxu0 0
    %1146 = vmatprep.subr.bf16.mxu0 0
    %1147 = vmatpush1.bf16.msra.mxu0 0
    %1148 = vmatprep.subr.bf16.mxu0 0
    %1149 = vmatpush1.bf16.msra.mxu0 0
    %1150 = vmatprep.subr.bf16.mxu0 0
    %1151 = vmatpush1.bf16.msra.mxu0 0
    %1152 = vmatprep.mubr.bf16.mxu0 0
    %1153 = vmatmul.mubr.bf16.gmra.mrb[0].mxu0 %v1115
    %v1154 = vpop.f32.mrb[0].mxu0
    %v1155 = vadd.f32 0.0, %v1154
    %v1156 = vpop.f32.mrb[0].mxu0
    %v1157 = vpop.f32.mrb[0].mxu0
    %v1158 = vpop.f32.mrb[0].mxu0
    %1159 = vdwg.mxu0
    %1160 = vrot.lane.b32.xlu0 %v473, 64
    %v1161 = vpop.permute.xlu0 %1160
    %v1163 = vsel %vm870, %v963, 0
    %v1166 = vsel %vm972, %v1161, 0
    %1168 = vmatprep.subr.bf16.mxu0 0
    %1169 = vmatpush1.bf16.msra.mxu0 %v1166
    %1170 = vmatprep.subr.bf16.mxu0 0
    %1171 = vmatpush1.bf16.msra.mxu0 0
    %1172 = vmatprep.subr.bf16.mxu0 0
    %1173 = vmatpush1.bf16.msra.mxu0 0
    %1174 = vmatprep.subr.bf16.mxu0 0
    %1175 = vmatpush1.bf16.msra.mxu0 0
    %1176 = vmatprep.subr.bf16.mxu0 0
    %1177 = vmatpush1.bf16.msra.mxu0 0
    %1178 = vmatprep.subr.bf16.mxu0 0
    %1179 = vmatpush1.bf16.msra.mxu0 0
    %1180 = vmatprep.subr.bf16.mxu0 0
    %1181 = vmatpush1.bf16.msra.mxu0 0
    %1182 = vmatprep.subr.bf16.mxu0 0
    %1183 = vmatpush1.bf16.msra.mxu0 0
    %1184 = vmatprep.subr.bf16.mxu0 0
    %1185 = vmatpush1.bf16.msra.mxu0 0
    %1186 = vmatprep.subr.bf16.mxu0 0
    %1187 = vmatpush1.bf16.msra.mxu0 0
    %1188 = vmatprep.subr.bf16.mxu0 0
    %1189 = vmatpush1.bf16.msra.mxu0 0
    %1190 = vmatprep.subr.bf16.mxu0 0
    %1191 = vmatpush1.bf16.msra.mxu0 0
    %1192 = vmatprep.subr.bf16.mxu0 0
    %1193 = vmatpush1.bf16.msra.mxu0 0
    %1194 = vmatprep.subr.bf16.mxu0 0
    %1195 = vmatpush1.bf16.msra.mxu0 0
    %1196 = vmatprep.subr.bf16.mxu0 0
    %1197 = vmatpush1.bf16.msra.mxu0 0
    %1198 = vmatprep.subr.bf16.mxu0 0
    %1199 = vmatpush1.bf16.msra.mxu0 0
    %1200 = vmatprep.mubr.bf16.mxu0 0
    %1201 = vmatmul.mubr.bf16.gmra.mrb[0].mxu0 %v1163
    %v1202 = vpop.f32.mrb[0].mxu0
    %v1203 = vadd.f32 0.0, %v1202
    %v1204 = vpop.f32.mrb[0].mxu0
    %v1205 = vpop.f32.mrb[0].mxu0
    %v1206 = vpop.f32.mrb[0].mxu0
    %1207 = vdwg.mxu0
    %1208 = vrot.lane.b32.xlu0 %v474, 64
    %v1209 = vpop.permute.xlu0 %1208
    %v1211 = vsel %vm870, %v964, 0
    %v1214 = vsel %vm972, %v1209, 0
    %1216 = vmatprep.subr.bf16.mxu0 0
    %1217 = vmatpush1.bf16.msra.mxu0 %v1214
    %1218 = vmatprep.subr.bf16.mxu0 0
    %1219 = vmatpush1.bf16.msra.mxu0 0
    %1220 = vmatprep.subr.bf16.mxu0 0
    %1221 = vmatpush1.bf16.msra.mxu0 0
    %1222 = vmatprep.subr.bf16.mxu0 0
    %1223 = vmatpush1.bf16.msra.mxu0 0
    %1224 = vmatprep.subr.bf16.mxu0 0
    %1225 = vmatpush1.bf16.msra.mxu0 0
    %1226 = vmatprep.subr.bf16.mxu0 0
    %1227 = vmatpush1.bf16.msra.mxu0 0
    %1228 = vmatprep.subr.bf16.mxu0 0
    %1229 = vmatpush1.bf16.msra.mxu0 0
    %1230 = vmatprep.subr.bf16.mxu0 0
    %1231 = vmatpush1.bf16.msra.mxu0 0
    %1232 = vmatprep.subr.bf16.mxu0 0
    %1233 = vmatpush1.bf16.msra.mxu0 0
    %1234 = vmatprep.subr.bf16.mxu0 0
    %1235 = vmatpush1.bf16.msra.mxu0 0
    %1236 = vmatprep.subr.bf16.mxu0 0
    %1237 = vmatpush1.bf16.msra.mxu0 0
    %1238 = vmatprep.subr.bf16.mxu0 0
    %1239 = vmatpush1.bf16.msra.mxu0 0
    %1240 = vmatprep.subr.bf16.mxu0 0
    %1241 = vmatpush1.bf16.msra.mxu0 0
    %1242 = vmatprep.subr.bf16.mxu0 0
    %1243 = vmatpush1.bf16.msra.mxu0 0
    %1244 = vmatprep.subr.bf16.mxu0 0
    %1245 = vmatpush1.bf16.msra.mxu0 0
    %1246 = vmatprep.subr.bf16.mxu0 0
    %1247 = vmatpush1.bf16.msra.mxu0 0
    %1248 = vmatprep.mubr.bf16.mxu0 0
    %1249 = vmatmul.mubr.bf16.gmra.mrb[0].mxu0 %v1211
    %v1250 = vpop.f32.mrb[0].mxu0
    %v1251 = vadd.f32 0.0, %v1250
    %v1252 = vpop.f32.mrb[0].mxu0
    %v1253 = vpop.f32.mrb[0].mxu0
    %v1254 = vpop.f32.mrb[0].mxu0
    %1255 = vdwg.mxu0
    %1256 = vrot.lane.b32.xlu0 %v475, 64
    %v1257 = vpop.permute.xlu0 %1256
    %v1259 = vsel %vm870, %v965, 0
    %v1262 = vsel %vm972, %v1257, 0
    %1264 = vmatprep.subr.bf16.mxu0 0
    %1265 = vmatpush1.bf16.msra.mxu0 %v1262
    %1266 = vmatprep.subr.bf16.mxu0 0
    %1267 = vmatpush1.bf16.msra.mxu0 0
    %1268 = vmatprep.subr.bf16.mxu0 0
    %1269 = vmatpush1.bf16.msra.mxu0 0
    %1270 = vmatprep.subr.bf16.mxu0 0
    %1271 = vmatpush1.bf16.msra.mxu0 0
    %1272 = vmatprep.subr.bf16.mxu0 0
    %1273 = vmatpush1.bf16.msra.mxu0 0
    %1274 = vmatprep.subr.bf16.mxu0 0
    %1275 = vmatpush1.bf16.msra.mxu0 0
    %1276 = vmatprep.subr.bf16.mxu0 0
    %1277 = vmatpush1.bf16.msra.mxu0 0
    %1278 = vmatprep.subr.bf16.mxu0 0
    %1279 = vmatpush1.bf16.msra.mxu0 0
    %1280 = vmatprep.subr.bf16.mxu0 0
    %1281 = vmatpush1.bf16.msra.mxu0 0
    %1282 = vmatprep.subr.bf16.mxu0 0
    %1283 = vmatpush1.bf16.msra.mxu0 0
    %1284 = vmatprep.subr.bf16.mxu0 0
    %1285 = vmatpush1.bf16.msra.mxu0 0
    %1286 = vmatprep.subr.bf16.mxu0 0
    %1287 = vmatpush1.bf16.msra.mxu0 0
    %1288 = vmatprep.subr.bf16.mxu0 0
    %1289 = vmatpush1.bf16.msra.mxu0 0
    %1290 = vmatprep.subr.bf16.mxu0 0
    %1291 = vmatpush1.bf16.msra.mxu0 0
    %1292 = vmatprep.subr.bf16.mxu0 0
    %1293 = vmatpush1.bf16.msra.mxu0 0
    %1294 = vmatprep.subr.bf16.mxu0 0
    %1295 = vmatpush1.bf16.msra.mxu0 0
    %1296 = vmatprep.mubr.bf16.mxu0 0
    %1297 = vmatmul.mubr.bf16.gmra.mrb[0].mxu0 %v1259
    %v1298 = vpop.f32.mrb[0].mxu0
    %v1299 = vadd.f32 0.0, %v1298
    %v1300 = vpop.f32.mrb[0].mxu0
    %v1301 = vpop.f32.mrb[0].mxu0
    %v1302 = vpop.f32.mrb[0].mxu0
    %1303 = vdwg.mxu0
    %1304 = vrot.lane.b32.xlu0 %v476, 64
    %v1305 = vpop.permute.xlu0 %1304
    %v1307 = vsel %vm870, %v966, 0
    %v1310 = vsel %vm972, %v1305, 0
    %1312 = vmatprep.subr.bf16.mxu0 0
    %1313 = vmatpush1.bf16.msra.mxu0 %v1310
    %1314 = vmatprep.subr.bf16.mxu0 0
    %1315 = vmatpush1.bf16.msra.mxu0 0
    %1316 = vmatprep.subr.bf16.mxu0 0
    %1317 = vmatpush1.bf16.msra.mxu0 0
    %1318 = vmatprep.subr.bf16.mxu0 0
    %1319 = vmatpush1.bf16.msra.mxu0 0
    %1320 = vmatprep.subr.bf16.mxu0 0
    %1321 = vmatpush1.bf16.msra.mxu0 0
    %1322 = vmatprep.subr.bf16.mxu0 0
    %1323 = vmatpush1.bf16.msra.mxu0 0
    %1324 = vmatprep.subr.bf16.mxu0 0
    %1325 = vmatpush1.bf16.msra.mxu0 0
    %1326 = vmatprep.subr.bf16.mxu0 0
    %1327 = vmatpush1.bf16.msra.mxu0 0
    %1328 = vmatprep.subr.bf16.mxu0 0
    %1329 = vmatpush1.bf16.msra.mxu0 0
    %1330 = vmatprep.subr.bf16.mxu0 0
    %1331 = vmatpush1.bf16.msra.mxu0 0
    %1332 = vmatprep.subr.bf16.mxu0 0
    %1333 = vmatpush1.bf16.msra.mxu0 0
    %1334 = vmatprep.subr.bf16.mxu0 0
    %1335 = vmatpush1.bf16.msra.mxu0 0
    %1336 = vmatprep.subr.bf16.mxu0 0
    %1337 = vmatpush1.bf16.msra.mxu0 0
    %1338 = vmatprep.subr.bf16.mxu0 0
    %1339 = vmatpush1.bf16.msra.mxu0 0
    %1340 = vmatprep.subr.bf16.mxu0 0
    %1341 = vmatpush1.bf16.msra.mxu0 0
    %1342 = vmatprep.subr.bf16.mxu0 0
    %1343 = vmatpush1.bf16.msra.mxu0 0
    %1344 = vmatprep.mubr.bf16.mxu0 0
    %1345 = vmatmul.mubr.bf16.gmra.mrb[0].mxu0 %v1307
    %v1346 = vpop.f32.mrb[0].mxu0
    %v1347 = vadd.f32 0.0, %v1346
    %v1348 = vpop.f32.mrb[0].mxu0
    %v1349 = vpop.f32.mrb[0].mxu0
    %v1350 = vpop.f32.mrb[0].mxu0
    %1351 = vdwg.mxu0
    %v1352 = vpack.c.bf16 %v1059, %v1011
    %v1353 = vpack.c.bf16 %v1155, %v1107
    %v1354 = vpack.c.bf16 %v1251, %v1203
    %v1355 = vpack.c.bf16 %v1347, %v1299
    %v1356 = vld [vmem:[%s3] sm:$0xf]
    %v1357 = vld [vmem:[%s3 + $0x4] sm:$0xf]
    %v1358 = vld [vmem:[%s3 + $0x8] sm:$0xf]
    %v1359 = vld [vmem:[%s3 + $0xc] sm:$0xf]
    %v1360 = vld [vmem:[%s3 + $0x10] sm:$0xf]
    %v1361 = vld [vmem:[%s3 + $0x14] sm:$0xf]
    %v1362 = vld [vmem:[%s3 + $0x18] sm:$0xf]
    %v1363 = vld [vmem:[%s3 + $0x1c] sm:$0xf]
    %v1364 = vld [vmem:[%s3 + $0x20] sm:$0xf]
    %v1365 = vld [vmem:[%s3 + $0x24] sm:$0xf]
    %v1366 = vld [vmem:[%s3 + $0x28] sm:$0xf]
    %v1367 = vld [vmem:[%s3 + $0x2c] sm:$0xf]
    %v1368 = vld [vmem:[%s3 + $0x30] sm:$0xf]
    %v1369 = vld [vmem:[%s3 + $0x34] sm:$0xf]
    %v1370 = vld [vmem:[%s3 + $0x38] sm:$0xf]
    %v1371 = vld [vmem:[%s3 + $0x3c] sm:$0xf]
    %v1376 = vunpack.c.l.b16 %v1356
    %v1377 = vunpack.c.l.b16 %v1357
    %v1378 = vunpack.c.l.b16 %v1358
    %v1379 = vunpack.c.l.b16 %v1359
    %v1380 = vpack.c.b16 %v1377, %v1376
    %v1381 = vpack.c.b16 %v1379, %v1378
    %v1385 = vsel %vm487, %v1352, 0
    %1387 = vmatprep.subr.bf16.mxu0 0
    %1388 = vmatpush1.bf16.msra.mxu0 %v1380
    %1389 = vmatprep.subr.bf16.mxu0 0
    %1390 = vmatpush1.bf16.msra.mxu0 %v1381
    %1391 = vmatprep.subr.bf16.mxu0 0
    %1392 = vmatpush1.bf16.msra.mxu0 0
    %1393 = vmatprep.subr.bf16.mxu0 0
    %1394 = vmatpush1.bf16.msra.mxu0 0
    %1395 = vmatprep.subr.bf16.mxu0 0
    %1396 = vmatpush1.bf16.msra.mxu0 0
    %1397 = vmatprep.subr.bf16.mxu0 0
    %1398 = vmatpush1.bf16.msra.mxu0 0
    %1399 = vmatprep.subr.bf16.mxu0 0
    %1400 = vmatpush1.bf16.msra.mxu0 0
    %1401 = vmatprep.subr.bf16.mxu0 0
    %1402 = vmatpush1.bf16.msra.mxu0 0
    %1403 = vmatprep.subr.bf16.mxu0 0
    %1404 = vmatpush1.bf16.msra.mxu0 0
    %1405 = vmatprep.subr.bf16.mxu0 0
    %1406 = vmatpush1.bf16.msra.mxu0 0
    %1407 = vmatprep.subr.bf16.mxu0 0
    %1408 = vmatpush1.bf16.msra.mxu0 0
    %1409 = vmatprep.subr.bf16.mxu0 0
    %1410 = vmatpush1.bf16.msra.mxu0 0
    %1411 = vmatprep.subr.bf16.mxu0 0
    %1412 = vmatpush1.bf16.msra.mxu0 0
    %1413 = vmatprep.subr.bf16.mxu0 0
    %1414 = vmatpush1.bf16.msra.mxu0 0
    %1415 = vmatprep.subr.bf16.mxu0 0
    %1416 = vmatpush1.bf16.msra.mxu0 0
    %1417 = vmatprep.subr.bf16.mxu0 0
    %1418 = vmatpush1.bf16.msra.mxu0 0
    %1419 = vmatprep.mubr.bf16.mxu0 0
    %1420 = vmatmul.mubr.bf16.gmra.mrb[0].mxu0 %v1385
    %v1421 = vpop.f32.mrb[0].mxu0
    %v1422 = vadd.f32 0.0, %v1421
    %v1423 = vpop.f32.mrb[0].mxu0
    %v1424 = vpop.f32.mrb[0].mxu0
    %v1425 = vadd.f32 0.0, %v1424
    %v1426 = vpop.f32.mrb[0].mxu0
    %1427 = vdwg.mxu0
    %v1432 = vunpack.c.l.b16 %v1360
    %v1433 = vunpack.c.l.b16 %v1361
    %v1434 = vunpack.c.l.b16 %v1362
    %v1435 = vunpack.c.l.b16 %v1363
    %v1436 = vpack.c.b16 %v1433, %v1432
    %v1437 = vpack.c.b16 %v1435, %v1434
    %v1441 = vsel %vm487, %v1353, 0
    %1443 = vmatprep.subr.bf16.mxu0 0
    %1444 = vmatpush1.bf16.msra.mxu0 %v1436
    %1445 = vmatprep.subr.bf16.mxu0 0
    %1446 = vmatpush1.bf16.msra.mxu0 %v1437
    %1447 = vmatprep.subr.bf16.mxu0 0
    %1448 = vmatpush1.bf16.msra.mxu0 0
    %1449 = vmatprep.subr.bf16.mxu0 0
    %1450 = vmatpush1.bf16.msra.mxu0 0
    %1451 = vmatprep.subr.bf16.mxu0 0
    %1452 = vmatpush1.bf16.msra.mxu0 0
    %1453 = vmatprep.subr.bf16.mxu0 0
    %1454 = vmatpush1.bf16.msra.mxu0 0
    %1455 = vmatprep.subr.bf16.mxu0 0
    %1456 = vmatpush1.bf16.msra.mxu0 0
    %1457 = vmatprep.subr.bf16.mxu0 0
    %1458 = vmatpush1.bf16.msra.mxu0 0
    %1459 = vmatprep.subr.bf16.mxu0 0
    %1460 = vmatpush1.bf16.msra.mxu0 0
    %1461 = vmatprep.subr.bf16.mxu0 0
    %1462 = vmatpush1.bf16.msra.mxu0 0
    %1463 = vmatprep.subr.bf16.mxu0 0
    %1464 = vmatpush1.bf16.msra.mxu0 0
    %1465 = vmatprep.subr.bf16.mxu0 0
    %1466 = vmatpush1.bf16.msra.mxu0 0
    %1467 = vmatprep.subr.bf16.mxu0 0
    %1468 = vmatpush1.bf16.msra.mxu0 0
    %1469 = vmatprep.subr.bf16.mxu0 0
    %1470 = vmatpush1.bf16.msra.mxu0 0
    %1471 = vmatprep.subr.bf16.mxu0 0
    %1472 = vmatpush1.bf16.msra.mxu0 0
    %1473 = vmatprep.subr.bf16.mxu0 0
    %1474 = vmatpush1.bf16.msra.mxu0 0
    %1475 = vmatprep.mubr.bf16.mxu0 0
    %1476 = vmatmul.mubr.bf16.gmra.mrb[0].mxu0 %v1441
    %v1477 = vpop.f32.mrb[0].mxu0
    %v1478 = vadd.f32 0.0, %v1477
    %v1479 = vpop.f32.mrb[0].mxu0
    %v1480 = vpop.f32.mrb[0].mxu0
    %v1481 = vadd.f32 0.0, %v1480
    %v1482 = vpop.f32.mrb[0].mxu0
    %1483 = vdwg.mxu0
    %v1488 = vunpack.c.l.b16 %v1364
    %v1489 = vunpack.c.l.b16 %v1365
    %v1490 = vunpack.c.l.b16 %v1366
    %v1491 = vunpack.c.l.b16 %v1367
    %v1492 = vpack.c.b16 %v1489, %v1488
    %v1493 = vpack.c.b16 %v1491, %v1490
    %v1497 = vsel %vm487, %v1354, 0
    %1499 = vmatprep.subr.bf16.mxu0 0
    %1500 = vmatpush1.bf16.msra.mxu0 %v1492
    %1501 = vmatprep.subr.bf16.mxu0 0
    %1502 = vmatpush1.bf16.msra.mxu0 %v1493
    %1503 = vmatprep.subr.bf16.mxu0 0
    %1504 = vmatpush1.bf16.msra.mxu0 0
    %1505 = vmatprep.subr.bf16.mxu0 0
    %1506 = vmatpush1.bf16.msra.mxu0 0
    %1507 = vmatprep.subr.bf16.mxu0 0
    %1508 = vmatpush1.bf16.msra.mxu0 0
    %1509 = vmatprep.subr.bf16.mxu0 0
    %1510 = vmatpush1.bf16.msra.mxu0 0
    %1511 = vmatprep.subr.bf16.mxu0 0
    %1512 = vmatpush1.bf16.msra.mxu0 0
    %1513 = vmatprep.subr.bf16.mxu0 0
    %1514 = vmatpush1.bf16.msra.mxu0 0
    %1515 = vmatprep.subr.bf16.mxu0 0
    %1516 = vmatpush1.bf16.msra.mxu0 0
    %1517 = vmatprep.subr.bf16.mxu0 0
    %1518 = vmatpush1.bf16.msra.mxu0 0
    %1519 = vmatprep.subr.bf16.mxu0 0
    %1520 = vmatpush1.bf16.msra.mxu0 0
    %1521 = vmatprep.subr.bf16.mxu0 0
    %1522 = vmatpush1.bf16.msra.mxu0 0
    %1523 = vmatprep.subr.bf16.mxu0 0
    %1524 = vmatpush1.bf16.msra.mxu0 0
    %1525 = vmatprep.subr.bf16.mxu0 0
    %1526 = vmatpush1.bf16.msra.mxu0 0
    %1527 = vmatprep.subr.bf16.mxu0 0
    %1528 = vmatpush1.bf16.msra.mxu0 0
    %1529 = vmatprep.subr.bf16.mxu0 0
    %1530 = vmatpush1.bf16.msra.mxu0 0
    %1531 = vmatprep.mubr.bf16.mxu0 0
    %1532 = vmatmul.mubr.bf16.gmra.mrb[0].mxu0 %v1497
    %v1533 = vpop.f32.mrb[0].mxu0
    %v1534 = vadd.f32 0.0, %v1533
    %v1535 = vpop.f32.mrb[0].mxu0
    %v1536 = vpop.f32.mrb[0].mxu0
    %v1537 = vadd.f32 0.0, %v1536
    %v1538 = vpop.f32.mrb[0].mxu0
    %1539 = vdwg.mxu0
    %v1544 = vunpack.c.l.b16 %v1368
    %v1545 = vunpack.c.l.b16 %v1369
    %v1546 = vunpack.c.l.b16 %v1370
    %v1547 = vunpack.c.l.b16 %v1371
    %v1548 = vpack.c.b16 %v1545, %v1544
    %v1549 = vpack.c.b16 %v1547, %v1546
    %v1553 = vsel %vm487, %v1355, 0
    %1555 = vmatprep.subr.bf16.mxu0 0
    %1556 = vmatpush1.bf16.msra.mxu0 %v1548
    %1557 = vmatprep.subr.bf16.mxu0 0
    %1558 = vmatpush1.bf16.msra.mxu0 %v1549
    %1559 = vmatprep.subr.bf16.mxu0 0
    %1560 = vmatpush1.bf16.msra.mxu0 0
    %1561 = vmatprep.subr.bf16.mxu0 0
    %1562 = vmatpush1.bf16.msra.mxu0 0
    %1563 = vmatprep.subr.bf16.mxu0 0
    %1564 = vmatpush1.bf16.msra.mxu0 0
    %1565 = vmatprep.subr.bf16.mxu0 0
    %1566 = vmatpush1.bf16.msra.mxu0 0
    %1567 = vmatprep.subr.bf16.mxu0 0
    %1568 = vmatpush1.bf16.msra.mxu0 0
    %1569 = vmatprep.subr.bf16.mxu0 0
    %1570 = vmatpush1.bf16.msra.mxu0 0
    %1571 = vmatprep.subr.bf16.mxu0 0
    %1572 = vmatpush1.bf16.msra.mxu0 0
    %1573 = vmatprep.subr.bf16.mxu0 0
    %1574 = vmatpush1.bf16.msra.mxu0 0
    %1575 = vmatprep.subr.bf16.mxu0 0
    %1576 = vmatpush1.bf16.msra.mxu0 0
    %1577 = vmatprep.subr.bf16.mxu0 0
    %1578 = vmatpush1.bf16.msra.mxu0 0
    %1579 = vmatprep.subr.bf16.mxu0 0
    %1580 = vmatpush1.bf16.msra.mxu0 0
    %1581 = vmatprep.subr.bf16.mxu0 0
    %1582 = vmatpush1.bf16.msra.mxu0 0
    %1583 = vmatprep.subr.bf16.mxu0 0
    %1584 = vmatpush1.bf16.msra.mxu0 0
    %1585 = vmatprep.subr.bf16.mxu0 0
    %1586 = vmatpush1.bf16.msra.mxu0 0
    %1587 = vmatprep.mubr.bf16.mxu0 0
    %1588 = vmatmul.mubr.bf16.gmra.mrb[0].mxu0 %v1553
    %v1589 = vpop.f32.mrb[0].mxu0
    %v1590 = vadd.f32 0.0, %v1589
    %v1591 = vpop.f32.mrb[0].mxu0
    %v1592 = vpop.f32.mrb[0].mxu0
    %v1593 = vadd.f32 0.0, %v1592
    %v1594 = vpop.f32.mrb[0].mxu0
    %1595 = vdwg.mxu0
    %v1596 = vadd.f32 %v1422, %v1478
    %v1597 = vadd.f32 %v1596, %v1534
    %v1598 = vadd.f32 %v1597, %v1590
    %v1599 = vadd.f32 %v1425, %v1481
    %v1600 = vadd.f32 %v1599, %v1537
    %v1601 = vadd.f32 %v1600, %v1593
    %v1602 = vadd.f32 %v1598, %v28
    %v1603 = vadd.f32 %v1601, %v29
    %1604 = vadd.xlane.f32.xlu0 %v1602
    %v1605 = vpop.xlane.xlu0 %1604
    %1606 = vadd.xlane.f32.xlu0 %v1603
    %v1607 = vpop.xlane.xlu0 %1606
    %v1608 = vrcp.pop 128.0
    %v1609 = vmul.f32 %v1605, %v1608
    %v1610 = vmul.f32 %v1607, %v1608
    %v1611 = vsub.f32 %v1602, %v1609
    %v1612 = vsub.f32 %v1603, %v1610
    %v1613 = vmul.f32 %v1611, %v1611
    %v1614 = vmul.f32 %v1612, %v1612
    %1615 = vadd.xlane.f32.xlu0 %v1613
    %v1616 = vpop.xlane.xlu0 %1615
    %1617 = vadd.xlane.f32.xlu0 %v1614
    %v1618 = vpop.xlane.xlu0 %1617
    %v1619 = vmul.f32 %v1616, %v1608
    %v1620 = vmul.f32 %v1618, %v1608
    %v1621 = vadd.f32 %v1619, 1e-05
    %v1622 = vadd.f32 %v1620, 1e-05
    %v1623 = vrsqrt.pop %v1621
    %v1624 = vrsqrt.pop %v1622
    %v1625 = vmul.f32 %v1611, %v1623
    %v1626 = vmul.f32 %v1612, %v1624
    %v1627 = vlaneseq
    %v1628 = vshrl.u32 %v1627, 7
    %v1629 = vsub.s32 0, %v1628
    %v1630 = vrot.slane %v31, %v1629
    %v1631 = vmul.f32 %v1625, %v1630
    %v1632 = vmul.f32 %v1626, %v1630
    %v1633 = vlaneseq
    %v1634 = vshrl.u32 %v1633, 7
    %v1635 = vsub.s32 1, %v1634
    %v1636 = vrot.slane %v31, %v1635
    %v1637 = vadd.f32 %v1631, %v1636
    %v1638 = vadd.f32 %v1632, %v1636
    %v1639 = vpack.c.bf16 %v1638, %v1637
    %v1640 = vld [vmem:[%s4] sm:$0xff]
    %v1641 = vld [vmem:[%s4 + $0x8] sm:$0xff]
    %v1642 = vld [vmem:[%s4 + $0x10] sm:$0xff]
    %v1643 = vld [vmem:[%s4 + $0x18] sm:$0xff]
    %v1644 = vld [vmem:[%s4 + $0x20] sm:$0xff]
    %v1645 = vld [vmem:[%s4 + $0x28] sm:$0xff]
    %v1646 = vld [vmem:[%s4 + $0x30] sm:$0xff]
    %v1647 = vld [vmem:[%s4 + $0x38] sm:$0xff]
    %v1648 = vld [vmem:[%s4 + $0x40] sm:$0xff]
    %v1649 = vld [vmem:[%s4 + $0x48] sm:$0xff]
    %v1650 = vld [vmem:[%s4 + $0x50] sm:$0xff]
    %v1651 = vld [vmem:[%s4 + $0x58] sm:$0xff]
    %v1652 = vld [vmem:[%s4 + $0x60] sm:$0xff]
    %v1653 = vld [vmem:[%s4 + $0x68] sm:$0xff]
    %v1654 = vld [vmem:[%s4 + $0x70] sm:$0xff]
    %v1655 = vld [vmem:[%s4 + $0x78] sm:$0xff]
    %v1656 = vlaneseq
    %v1657 = vshrl.u32 %v1656, 7
    %v1658 = vsub.s32 2, %v1657
    %v1659 = vrot.slane %v31, %v1658
    %v1660 = vlaneseq
    %v1661 = vshrl.u32 %v1660, 7
    %v1662 = vsub.s32 2, %v1661
    %v1663 = vrot.slane %v32, %v1662
    %v1680 = vunpack.c.l.b16 %v1640
    %v1681 = vunpack.c.h.b16 %v1640
    %v1682 = vunpack.c.l.b16 %v1641
    %v1683 = vunpack.c.h.b16 %v1641
    %v1684 = vunpack.c.l.b16 %v1642
    %v1685 = vunpack.c.h.b16 %v1642
    %v1686 = vunpack.c.l.b16 %v1643
    %v1687 = vunpack.c.h.b16 %v1643
    %v1688 = vunpack.c.l.b16 %v1644
    %v1689 = vunpack.c.h.b16 %v1644
    %v1690 = vunpack.c.l.b16 %v1645
    %v1691 = vunpack.c.h.b16 %v1645
    %v1692 = vunpack.c.l.b16 %v1646
    %v1693 = vunpack.c.h.b16 %v1646
    %v1694 = vunpack.c.l.b16 %v1647
    %v1695 = vunpack.c.h.b16 %v1647
    %v1696 = vunpack.c.l.b16 %v1648
    %v1697 = vunpack.c.h.b16 %v1648
    %v1698 = vunpack.c.l.b16 %v1649
    %v1699 = vunpack.c.h.b16 %v1649
    %v1700 = vunpack.c.l.b16 %v1650
    %v1701 = vunpack.c.h.b16 %v1650
    %v1702 = vunpack.c.l.b16 %v1651
    %v1703 = vunpack.c.h.b16 %v1651
    %v1704 = vunpack.c.l.b16 %v1652
    %v1705 = vunpack.c.h.b16 %v1652
    %v1706 = vunpack.c.l.b16 %v1653
    %v1707 = vunpack.c.h.b16 %v1653
    %v1708 = vunpack.c.l.b16 %v1654
    %v1709 = vunpack.c.h.b16 %v1654
    %v1710 = vunpack.c.l.b16 %v1655
    %v1711 = vunpack.c.h.b16 %v1655
    %v1712 = vpack.c.b16 %v1682, %v1680
    %v1713 = vpack.c.b16 %v1683, %v1681
    %v1714 = vpack.c.b16 %v1686, %v1684
    %v1715 = vpack.c.b16 %v1687, %v1685
    %v1716 = vpack.c.b16 %v1690, %v1688
    %v1717 = vpack.c.b16 %v1691, %v1689
    %v1718 = vpack.c.b16 %v1694, %v1692
    %v1719 = vpack.c.b16 %v1695, %v1693
    %v1720 = vpack.c.b16 %v1698, %v1696
    %v1721 = vpack.c.b16 %v1699, %v1697
    %v1722 = vpack.c.b16 %v1702, %v1700
    %v1723 = vpack.c.b16 %v1703, %v1701
    %v1724 = vpack.c.b16 %v1706, %v1704
    %v1725 = vpack.c.b16 %v1707, %v1705
    %v1726 = vpack.c.b16 %v1710, %v1708
    %v1727 = vpack.c.b16 %v1711, %v1709
    %1744 = vmatprep.subr.bf16.mxu0 %v1713
    %1745 = vmatpush1.bf16.msra.mxu0 %v1712
    %1746 = vmatprep.subr.bf16.mxu0 %v1715
    %1747 = vmatpush1.bf16.msra.mxu0 %v1714
    %1748 = vmatprep.subr.bf16.mxu0 %v1717
    %1749 = vmatpush1.bf16.msra.mxu0 %v1716
    %1750 = vmatprep.subr.bf16.mxu0 %v1719
    %1751 = vmatpush1.bf16.msra.mxu0 %v1718
    %1752 = vmatprep.subr.bf16.mxu0 %v1721
    %1753 = vmatpush1.bf16.msra.mxu0 %v1720
    %1754 = vmatprep.subr.bf16.mxu0 %v1723
    %1755 = vmatpush1.bf16.msra.mxu0 %v1722
    %1756 = vmatprep.subr.bf16.mxu0 %v1725
    %1757 = vmatpush1.bf16.msra.mxu0 %v1724
    %1758 = vmatprep.subr.bf16.mxu0 %v1727
    %1759 = vmatpush1.bf16.msra.mxu0 %v1726
    %1760 = vmatprep.subr.bf16.mxu0 0
    %1761 = vmatpush1.bf16.msra.mxu0 0
    %1762 = vmatprep.subr.bf16.mxu0 0
    %1763 = vmatpush1.bf16.msra.mxu0 0
    %1764 = vmatprep.subr.bf16.mxu0 0
    %1765 = vmatpush1.bf16.msra.mxu0 0
    %1766 = vmatprep.subr.bf16.mxu0 0
    %1767 = vmatpush1.bf16.msra.mxu0 0
    %1768 = vmatprep.subr.bf16.mxu0 0
    %1769 = vmatpush1.bf16.msra.mxu0 0
    %1770 = vmatprep.subr.bf16.mxu0 0
    %1771 = vmatpush1.bf16.msra.mxu0 0
    %1772 = vmatprep.subr.bf16.mxu0 0
    %1773 = vmatpush1.bf16.msra.mxu0 0
    %1774 = vmatprep.subr.bf16.mxu0 0
    %1775 = vmatpush1.bf16.msra.mxu0 0
    %1776 = vmatprep.mubr.bf16.mxu0 0
    %1777 = vmatmul.mubr.bf16.gmra.mrb[0].mxu0 %v1639
    %v1778 = vpop.f32.mrb[0].mxu0
    %v1779 = vadd.f32 %v1659, %v1778
    %v1780 = vpop.f32.mrb[0].mxu0
    %v1781 = vadd.f32 %v1663, %v1780
    %v1782 = vpop.f32.mrb[0].mxu0
    %v1783 = vadd.f32 %v1659, %v1782
    %v1784 = vpop.f32.mrb[0].mxu0
    %v1785 = vadd.f32 %v1663, %v1784
    %1786 = vdwg.mxu0
    %v1787 = vmax.f32 %v1779, 0.0
    %v1788 = vmax.f32 %v1781, 0.0
    %v1789 = vmax.f32 %v1783, 0.0
    %v1790 = vmax.f32 %v1785, 0.0
    %v1791 = vpack.c.bf16 %v1789, %v1787
    %v1792 = vpack.c.bf16 %v1790, %v1788
    %v1793 = vld [vmem:[%s5] sm:$0xf]
    %v1794 = vld [vmem:[%s5 + $0x4] sm:$0xf]
    %v1795 = vld [vmem:[%s5 + $0x8] sm:$0xf]
    %v1796 = vld [vmem:[%s5 + $0xc] sm:$0xf]
    %v1797 = vld [vmem:[%s5 + $0x10] sm:$0xf]
    %v1798 = vld [vmem:[%s5 + $0x14] sm:$0xf]
    %v1799 = vld [vmem:[%s5 + $0x18] sm:$0xf]
    %v1800 = vld [vmem:[%s5 + $0x1c] sm:$0xf]
    %v1801 = vld [vmem:[%s5 + $0x20] sm:$0xf]
    %v1802 = vld [vmem:[%s5 + $0x24] sm:$0xf]
    %v1803 = vld [vmem:[%s5 + $0x28] sm:$0xf]
    %v1804 = vld [vmem:[%s5 + $0x2c] sm:$0xf]
    %v1805 = vld [vmem:[%s5 + $0x30] sm:$0xf]
    %v1806 = vld [vmem:[%s5 + $0x34] sm:$0xf]
    %v1807 = vld [vmem:[%s5 + $0x38] sm:$0xf]
    %v1808 = vld [vmem:[%s5 + $0x3c] sm:$0xf]
    %v1809 = vld [vmem:[%s5 + $0x40] sm:$0xf]
    %v1810 = vld [vmem:[%s5 + $0x44] sm:$0xf]
    %v1811 = vld [vmem:[%s5 + $0x48] sm:$0xf]
    %v1812 = vld [vmem:[%s5 + $0x4c] sm:$0xf]
    %v1813 = vld [vmem:[%s5 + $0x50] sm:$0xf]
    %v1814 = vld [vmem:[%s5 + $0x54] sm:$0xf]
    %v1815 = vld [vmem:[%s5 + $0x58] sm:$0xf]
    %v1816 = vld [vmem:[%s5 + $0x5c] sm:$0xf]
    %v1817 = vld [vmem:[%s5 + $0x60] sm:$0xf]
    %v1818 = vld [vmem:[%s5 + $0x64] sm:$0xf]
    %v1819 = vld [vmem:[%s5 + $0x68] sm:$0xf]
    %v1820 = vld [vmem:[%s5 + $0x6c] sm:$0xf]
    %v1821 = vld [vmem:[%s5 + $0x70] sm:$0xf]
    %v1822 = vld [vmem:[%s5 + $0x74] sm:$0xf]
    %v1823 = vld [vmem:[%s5 + $0x78] sm:$0xf]
    %v1824 = vld [vmem:[%s5 + $0x7c] sm:$0xf]
    %v1825 = vlaneseq
    %v1826 = vshrl.u32 %v1825, 7
    %v1827 = vsub.s32 3, %v1826
    %v1828 = vrot.slane %v31, %v1827
    %v1861 = vunpack.c.l.b16 %v1793
    %v1862 = vunpack.c.l.b16 %v1794
    %v1863 = vunpack.c.l.b16 %v1795
    %v1864 = vunpack.c.l.b16 %v1796
    %v1865 = vunpack.c.l.b16 %v1797
    %v1866 = vunpack.c.l.b16 %v1798
    %v1867 = vunpack.c.l.b16 %v1799
    %v1868 = vunpack.c.l.b16 %v1800
    %v1869 = vunpack.c.l.b16 %v1801
    %v1870 = vunpack.c.l.b16 %v1802
    %v1871 = vunpack.c.l.b16 %v1803
    %v1872 = vunpack.c.l.b16 %v1804
    %v1873 = vunpack.c.l.b16 %v1805
    %v1874 = vunpack.c.l.b16 %v1806
    %v1875 = vunpack.c.l.b16 %v1807
    %v1876 = vunpack.c.l.b16 %v1808
    %v1877 = vunpack.c.l.b16 %v1809
    %v1878 = vunpack.c.l.b16 %v1810
    %v1879 = vunpack.c.l.b16 %v1811
    %v1880 = vunpack.c.l.b16 %v1812
    %v1881 = vunpack.c.l.b16 %v1813
    %v1882 = vunpack.c.l.b16 %v1814
    %v1883 = vunpack.c.l.b16 %v1815
    %v1884 = vunpack.c.l.b16 %v1816
    %v1885 = vunpack.c.l.b16 %v1817
    %v1886 = vunpack.c.l.b16 %v1818
    %v1887 = vunpack.c.l.b16 %v1819
    %v1888 = vunpack.c.l.b16 %v1820
    %v1889 = vunpack.c.l.b16 %v1821
    %v1890 = vunpack.c.l.b16 %v1822
    %v1891 = vunpack.c.l.b16 %v1823
    %v1892 = vunpack.c.l.b16 %v1824
    %v1893 = vpack.c.b16 %v1862, %v1861
    %v1894 = vpack.c.b16 %v1864, %v1863
    %v1895 = vpack.c.b16 %v1866, %v1865
    %v1896 = vpack.c.b16 %v1868, %v1867
    %v1897 = vpack.c.b16 %v1870, %v1869
    %v1898 = vpack.c.b16 %v1872, %v1871
    %v1899 = vpack.c.b16 %v1874, %v1873
    %v1900 = vpack.c.b16 %v1876, %v1875
    %v1901 = vpack.c.b16 %v1878, %v1877
    %v1902 = vpack.c.b16 %v1880, %v1879
    %v1903 = vpack.c.b16 %v1882, %v1881
    %v1904 = vpack.c.b16 %v1884, %v1883
    %v1905 = vpack.c.b16 %v1886, %v1885
    %v1906 = vpack.c.b16 %v1888, %v1887
    %v1907 = vpack.c.b16 %v1890, %v1889
    %v1908 = vpack.c.b16 %v1892, %v1891
    %1925 = vmatprep.subr.bf16.mxu0 0
    %1926 = vmatpush1.bf16.msra.mxu0 %v1893
    %1927 = vmatprep.subr.bf16.mxu0 0
    %1928 = vmatpush1.bf16.msra.mxu0 %v1894
    %1929 = vmatprep.subr.bf16.mxu0 0
    %1930 = vmatpush1.bf16.msra.mxu0 %v1895
    %1931 = vmatprep.subr.bf16.mxu0 0
    %1932 = vmatpush1.bf16.msra.mxu0 %v1896
    %1933 = vmatprep.subr.bf16.mxu0 0
    %1934 = vmatpush1.bf16.msra.mxu0 %v1897
    %1935 = vmatprep.subr.bf16.mxu0 0
    %1936 = vmatpush1.bf16.msra.mxu0 %v1898
    %1937 = vmatprep.subr.bf16.mxu0 0
    %1938 = vmatpush1.bf16.msra.mxu0 %v1899
    %1939 = vmatprep.subr.bf16.mxu0 0
    %1940 = vmatpush1.bf16.msra.mxu0 %v1900
    %1941 = vmatprep.subr.bf16.mxu0 0
    %1942 = vmatpush1.bf16.msra.mxu0 %v1901
    %1943 = vmatprep.subr.bf16.mxu0 0
    %1944 = vmatpush1.bf16.msra.mxu0 %v1902
    %1945 = vmatprep.subr.bf16.mxu0 0
    %1946 = vmatpush1.bf16.msra.mxu0 %v1903
    %1947 = vmatprep.subr.bf16.mxu0 0
    %1948 = vmatpush1.bf16.msra.mxu0 %v1904
    %1949 = vmatprep.subr.bf16.mxu0 0
    %1950 = vmatpush1.bf16.msra.mxu0 %v1905
    %1951 = vmatprep.subr.bf16.mxu0 0
    %1952 = vmatpush1.bf16.msra.mxu0 %v1906
    %1953 = vmatprep.subr.bf16.mxu0 0
    %1954 = vmatpush1.bf16.msra.mxu0 %v1907
    %1955 = vmatprep.subr.bf16.mxu0 0
    %1956 = vmatpush1.bf16.msra.mxu0 %v1908
    %1957 = vmatprep.mubr.bf16.mxu0 %v1792
    %1958 = vmatmul.mubr.bf16.gmra.mrb[0].mxu0 %v1791
    %v1959 = vpop.f32.mrb[0].mxu0
    %v1960 = vadd.f32 %v1828, %v1959
    %v1961 = vpop.f32.mrb[0].mxu0
    %v1962 = vpop.f32.mrb[0].mxu0
    %v1963 = vadd.f32 %v1828, %v1962
    %v1964 = vpop.f32.mrb[0].mxu0
    %1965 = vdwg.mxu0
    %v1966 = vadd.f32 %v1960, %v1637
    %v1967 = vadd.f32 %v1963, %v1638
    %1968 = vadd.xlane.f32.xlu0 %v1966
    %v1969 = vpop.xlane.xlu0 %1968
    %1970 = vadd.xlane.f32.xlu0 %v1967
    %v1971 = vpop.xlane.xlu0 %1970
    %v1972 = vmul.f32 %v1969, %v1608
    %v1973 = vmul.f32 %v1971, %v1608
    %v1974 = vsub.f32 %v1966, %v1972
    %v1975 = vsub.f32 %v1967, %v1973
    %v1976 = vmul.f32 %v1974, %v1974
    %v1977 = vmul.f32 %v1975, %v1975
    %1978 = vadd.xlane.f32.xlu0 %v1976
    %v1979 = vpop.xlane.xlu0 %1978
    %1980 = vadd.xlane.f32.xlu0 %v1977
    %v1981 = vpop.xlane.xlu0 %1980
    %v1982 = vmul.f32 %v1979, %v1608
    %v1983 = vmul.f32 %v1981, %v1608
    %v1984 = vadd.f32 %v1982, 1e-05
    %v1985 = vadd.f32 %v1983, 1e-05
    %v1986 = vrsqrt.pop %v1984
    %v1987 = vrsqrt.pop %v1985
    %v1988 = vmul.f32 %v1974, %v1986
    %v1989 = vmul.f32 %v1975, %v1987
    %v1990 = vlaneseq
    %v1991 = vshrl.u32 %v1990, 7
    %v1992 = vsub.s32 4, %v1991
    %v1993 = vrot.slane %v31, %v1992
    %v1994 = vmul.f32 %v1988, %v1993
    %v1995 = vmul.f32 %v1989, %v1993
    %v1996 = vlaneseq
    %v1997 = vshrl.u32 %v1996, 7
    %v1998 = vsub.s32 5, %v1997
    %v1999 = vrot.slane %v31, %v1998
    %v2000 = vadd.f32 %v1994, %v1999
    %v2001 = vadd.f32 %v1995, %v1999
    %2002 = vst [vmem:[#allocation2] sm:$0xff] %v2000
    %2003 = vst [vmem:[#allocation2 + $0x8] sm:$0xff] %v2001
    // Predicated region
    $region30: #{run.1} parent=1 // pred_check
      _
    $region31: #{run.1} parent=1 // pred_check_branch
      %2005 = sbr.rel (0) target = $region33
    $region32: #{run.1} parent=1 // pred_region
      %s2007 = ssub.s32 256, 256
      %2008 = vsyncadd [#allocation3], %s2007
      %s2009 = sshll.u32 [#allocation2], 4
      %s2010 = int_to_ptr.vmem [resolvable:$true] %s2009
      %2015 = dma.vmem_to_hbm [thread:$0]  %s2010, 256, %s7, [#allocation3], 128, 128, 8
    $region33: #{run.1} parent=1 // pred_fallthru
      _
    // Predicated region
    $region34: #{run.1} parent=1 // pred_check
      _
    $region35: #{run.1} parent=1 // pred_check_branch
      %2017 = sbr.rel (0) target = $region37
    $region36: #{run.1} parent=1 // pred_region
      %2018 = dma.done [#allocation3], 256
    $region37: #{run.1} parent=1 // pred_fallthru
      _
    %2019 = vsyncpa [#allocation3], 1

</llo_original>
